<compile_context>
chip_gen: v7x
topology: tpu7x:2x2x1
jax: 0.10.0
libtpu: 0.0.40
codegen_flags: <defaults>
</compile_context>

<pallas_src>
import math
import functools

import jax
import jax.numpy as jnp
from jax.experimental import pallas as pl
from jax.experimental.pallas import tpu as pltpu

EMBED_SIZE = 128
NUM_HEADS = 4
HEAD_DIM = EMBED_SIZE // NUM_HEADS

_MIB = 1024 * 1024


def mha_kernel(x_ref, wqkv_ref, bqkv_ref, wo_ref, bo_ref, o_ref, *,
               num_heads, head_dim, batch_tile, seq_len, compute_dtype):
    embed = num_heads * head_dim
    m = batch_tile * seq_len

    # Flatten the (Bt, S, E) tile to (M, E): every projection matmul gets a tall
    # M dimension (better MXU utilization, fewer grid steps).
    x = x_ref[...].reshape(m, embed).astype(compute_dtype)

    # Fused Q|K|V projection: one (M, E) @ (E, 3E) matmul, f32 accumulation.
    # The 1/sqrt(head_dim) softmax scale is already folded into the Q columns
    # of wqkv/bqkv by the wrapper. Weights arrive pre-cast to compute_dtype.
    qkv = jnp.dot(x, wqkv_ref[...], preferred_element_type=jnp.float32) + bqkv_ref[...]

    wo = wo_ref[...]                                  # (E, E), compute_dtype

    acc = jnp.zeros((m, embed), jnp.float32)
    # Static loop over heads (num_heads small & fixed). Attention is batched
    # over the Bt axis so different batch elements never attend to each other.
    for h in range(num_heads):
        lo = h * head_dim
        qh = qkv[:, lo:lo + head_dim] \
            .reshape(batch_tile, seq_len, head_dim).astype(compute_dtype)
        kh = qkv[:, embed + lo:embed + lo + head_dim] \
            .reshape(batch_tile, seq_len, head_dim).astype(compute_dtype)
        vh = qkv[:, 2 * embed + lo:2 * embed + lo + head_dim] \
            .reshape(batch_tile, seq_len, head_dim).astype(compute_dtype)

        # scores[b] = qh[b] @ kh[b].T  -> (Bt, S, S), already includes 1/sqrt(D).
        scores = jax.lax.dot_general(
            qh, kh, (((2,), (2,)), ((0,), (0,))),
            preferred_element_type=jnp.float32)

        # Numerically-stable softmax, normalization deferred past the PV matmul.
        mmax = jnp.max(scores, axis=-1, keepdims=True)
        e = jnp.exp(scores - mmax)                    # (Bt, S, S) f32
        denom = jnp.sum(e, axis=-1, keepdims=True)    # (Bt, S, 1) f32

        # out[b] = e[b] @ vh[b]  -> (Bt, S, D); divide the small result instead
        # of the big (Bt, S, S) probs. reciprocal(approx=True) runs on the EUP.
        oh = jax.lax.dot_general(
            e.astype(compute_dtype), vh, (((2,), (1,)), ((0,), (0,))),
            preferred_element_type=jnp.float32)
        oh = oh * pl.reciprocal(denom, approx=True)

        # Distribute Wo over heads: acc += oh @ Wo[h*D:(h+1)*D, :].
        # Replaces the lane-axis concat of per-head outputs.
        acc = acc + jnp.dot(oh.reshape(m, head_dim).astype(compute_dtype),
                            wo[lo:lo + head_dim, :],
                            preferred_element_type=jnp.float32)

    y = acc + bo_ref[...]
    o_ref[...] = y.reshape(batch_tile, seq_len, embed).astype(o_ref.dtype)


def _tile_vmem_bytes(bt, seq, embed, num_heads, cdt_bytes):
    """Rough per-grid-step VMEM footprint (bytes) for a (Bt, S, E) batch tile."""
    f32 = 4
    m = bt * seq
    io = 2 * 2 * m * embed * f32                     # x + out, double-buffered, f32
    qkv = m * 3 * embed * (f32 + cdt_bytes)          # f32 accum + compute-dtype slices
    acc = m * embed * f32                            # f32 accumulator
    attn = bt * seq * seq * (3 * f32 + cdt_bytes)    # scores + exp + slack + cast copy
    oh = 2 * bt * seq * (embed // num_heads) * f32   # per-head output + scaled copy
    weights = (embed * 3 * embed + embed * embed) * cdt_bytes * 2
    misc = 1 * _MIB
    return io + qkv + acc + attn + oh + weights + misc


def _pick_batch_tile(batch, seq, embed, num_heads, cdt_bytes, *,
                     target_rows=512, max_rows=2048,
                     vmem_budget=44 * _MIB):
    """Pick Bt (a divisor of batch) so Bt*S fills the MXU M dim (~512 rows)
    while the tile footprint fits the VMEM budget; keep >=2 grid steps when
    possible so both v7x TensorCores get work. Returns (Bt, vmem_limit_bytes)."""
    divisors = [d for d in range(1, batch + 1) if batch % d == 0]
    feasible = [d for d in divisors
                if _tile_vmem_bytes(d, seq, embed, num_heads, cdt_bytes) <= vmem_budget
                and d * seq <= max_rows]
    if not feasible:
        # TODO(synk): S so large that even Bt=1 exceeds the budget -> needs the
        # flash-style key-axis tiling; run Bt=1 with a raised limit for now.
        feasible = [1]

    reaching = [d for d in feasible if d * seq >= target_rows]
    bt = min(reaching) if reaching else max(feasible)

    if batch // bt < 2:                              # prefer >=2 grid steps (megacore)
        alt = [d for d in feasible if batch // d >= 2]
        if alt:
            bt = max(alt)

    footprint = _tile_vmem_bytes(bt, seq, embed, num_heads, cdt_bytes)
    # Deterministic buffer planning; never above ~56 MiB (v7x has 64 MiB VMEM/TC).
    vmem_limit = int(min(56 * _MIB, max(32 * _MIB, footprint * 3 // 2)))
    return bt, vmem_limit


def multi_head_attention(x, params, *, num_heads=NUM_HEADS,
                         compute_dtype=jnp.bfloat16):
    """x: (B, S, E) float32. params: dict of (in, out) weights and (1, E) biases.

    compute_dtype=bfloat16 (default) uses the bf16-native MXU on v5e/v6e/v7x with
    f32 accumulation; pass jnp.float32 for tight numerical parity with PyTorch.
    """
    B, S, E = x.shape
    assert E % num_heads == 0
    head_dim = E // num_heads
    scale = 1.0 / math.sqrt(head_dim)
    cdt_bytes = jnp.dtype(compute_dtype).itemsize

    # Fold the softmax scale into the Q projection, fuse Q|K|V, pre-cast weights
    # to the compute dtype (halves weight DMA bytes, no in-kernel casts).
    wqkv = jnp.concatenate(
        [params["wq"] * scale, params["wk"], params["wv"]], axis=1
    ).astype(compute_dtype)                                          # (E, 3E)
    bqkv = jnp.concatenate(
        [params["bq"] * scale, params["bk"], params["bv"]], axis=1
    ).astype(jnp.float32)                                            # (1, 3E) f32 (added to f32 accum)
    wo = params["wo"].astype(compute_dtype)                          # (E, E)
    bo = params["bo"].astype(jnp.float32)                            # (1, E)

    bt, vmem_limit = _pick_batch_tile(B, S, E, num_heads, cdt_bytes)
    assert B % bt == 0
    grid_b = B // bt

    kernel = functools.partial(
        mha_kernel, num_heads=num_heads, head_dim=head_dim,
        batch_tile=bt, seq_len=S, compute_dtype=compute_dtype)

    xo_spec = pl.BlockSpec((bt, S, E), lambda b: (b, 0, 0))
    wqkv_spec = pl.BlockSpec((E, 3 * E), lambda b: (0, 0))
    bqkv_spec = pl.BlockSpec((1, 3 * E), lambda b: (0, 0))
    wo_spec = pl.BlockSpec((E, E), lambda b: (0, 0))
    bo_spec = pl.BlockSpec((1, E), lambda b: (0, 0))

    # Advisory cost for XLA's scheduler (exp-heavy kernel).
    flops = (2 * B * S * E * 3 * E            # fused QKV projection
             + 2 * B * S * S * E              # Q @ K^T over all heads
             + 2 * B * S * S * E              # P @ V over all heads
             + 2 * B * S * E * E)             # output projection
    cost = pl.CostEstimate(
        flops=flops,
        transcendentals=B * num_heads * S * S,
        bytes_accessed=(2 * B * S * E * x.dtype.itemsize
                        + (E * 3 * E + E * E) * cdt_bytes
                        + 4 * E * 4))

    return pl.pallas_call(
        kernel,
        out_shape=jax.ShapeDtypeStruct((B, S, E), x.dtype),
        grid_spec=pltpu.PrefetchScalarGridSpec(
            num_scalar_prefetch=0,
            grid=(grid_b,),
            in_specs=[xo_spec, wqkv_spec, bqkv_spec, wo_spec, bo_spec],
            out_specs=xo_spec,
        ),
        compiler_params=pltpu.CompilerParams(
            dimension_semantics=("parallel",),     # batch axis -> both TCs on v7x
            vmem_limit_bytes=vmem_limit),
        cost_estimate=cost,
    )(x, wqkv, bqkv, wo, bo)


def init_params(key, embed_size):
    """Deterministic init mimicking nn.Linear default U(-1/sqrt(in), 1/sqrt(in)).
    Weights stored as (in, out) (already transposed for x @ W)."""
    bound = 1.0 / math.sqrt(embed_size)
    keys = jax.random.split(key, 8)

    def u(k, shape):
        return jax.random.uniform(k, shape, jnp.float32, -bound, bound)

    return {
        "wq": u(keys[0], (embed_size, embed_size)), "bq": u(keys[1], (1, embed_size)),
        "wk": u(keys[2], (embed_size, embed_size)), "bk": u(keys[3], (1, embed_size)),
        "wv": u(keys[4], (embed_size, embed_size)), "bv": u(keys[5], (1, embed_size)),
        "wo": u(keys[6], (embed_size, embed_size)), "bo": u(keys[7], (1, embed_size)),
    }


def reference_mha(x, params, num_heads=NUM_HEADS):
    B, S, E = x.shape
    D = E // num_heads

    def proj(w, b):
        return x @ w + b[0]

    q = proj(params["wq"], params["bq"]).reshape(B, S, num_heads, D).transpose(0, 2, 1, 3)
    k = proj(params["wk"], params["bk"]).reshape(B, S, num_heads, D).transpose(0, 2, 1, 3)
    v = proj(params["wv"], params["bv"]).reshape(B, S, num_heads, D).transpose(0, 2, 1, 3)
    scores = jnp.einsum("bhqd,bhkd->bhqk", q, k) / math.sqrt(D)
    w = jax.nn.softmax(scores, axis=-1)
    out = jnp.einsum("bhqk,bhkd->bhqd", w, v).transpose(0, 2, 1, 3).reshape(B, S, E)
    return out @ params["wo"] + params["bo"][0]


if __name__ == "__main__":
    key = jax.random.PRNGKey(0)
    k_x, k_p = jax.random.split(key)

    B, S = 2, 8
    x = jax.random.normal(k_x, (B, S, EMBED_SIZE), jnp.float32)
    params = init_params(k_p, EMBED_SIZE)

    ref = reference_mha(x, params)

    # Default bf16 compute path (MXU-native on v5e/v6e/v7x, f32 accumulation).
    out = jax.block_until_ready(multi_head_attention(x, params))
    assert out.shape == (B, S, EMBED_SIZE)
    assert jnp.allclose(out, ref, atol=5e-2, rtol=5e-2), "bf16 path mismatch vs reference"

    # f32 compute path for tight parity (only error source: approx EUP reciprocal).
    out_f32 = jax.block_until_ready(
        multi_head_attention(x, params, compute_dtype=jnp.float32))
    assert jnp.allclose(out_f32, ref, atol=2e-3, rtol=2e-3), "f32 path mismatch vs reference"

    print("KERNEL_OK")
</pallas_src>

<mosaic_0001>
module attributes {stable_mosaic.version = 11 : i64} {
  func.func @mha_kernel(%arg0: i32, %arg1: memref<1x8x128xf32, #tpu.memory_space<vmem>>, %arg2: memref<128x384xbf16, #tpu.memory_space<vmem>>, %arg3: memref<1x384xf32, #tpu.memory_space<vmem>>, %arg4: memref<128x128xbf16, #tpu.memory_space<vmem>>, %arg5: memref<1x128xf32, #tpu.memory_space<vmem>>, %arg6: memref<1x8x128xf32, #tpu.memory_space<vmem>>) attributes {dimension_semantics = [#tpu.dimension_semantics<parallel>], iteration_bounds = array<i64: 2>, scalar_prefetch = 0 : i64, scratch_operands = 0 : i64, tpu.core_type = #tpu.core_type<tc>, window_params = [{transform_indices = @transform_0, window_bounds = array<i64: 1, 8, 128>}, {pipeline_mode = #tpu.pipeline_mode<synchronous>, transform_indices = @transform_1, window_bounds = array<i64: 128, 384>}, {pipeline_mode = #tpu.pipeline_mode<synchronous>, transform_indices = @transform_2, window_bounds = array<i64: 1, 384>}, {pipeline_mode = #tpu.pipeline_mode<synchronous>, transform_indices = @transform_3, window_bounds = array<i64: 128, 128>}, {pipeline_mode = #tpu.pipeline_mode<synchronous>, transform_indices = @transform_4, window_bounds = array<i64: 1, 128>}, {transform_indices = @transform_5, window_bounds = array<i64: 1, 8, 128>}]} {
    %c0 = arith.constant 0 : index
    %c0_0 = arith.constant 0 : index
    %c0_1 = arith.constant 0 : index
    %0 = vector.load %arg1[%c0, %c0_0, %c0_1] : memref<1x8x128xf32, #tpu.memory_space<vmem>>, vector<1x8x128xf32>
    %1 = vector.shape_cast %0 : vector<1x8x128xf32> to vector<8x128xf32>
    %2 = arith.truncf %1 : vector<8x128xf32> to vector<8x128xbf16>
    %c0_2 = arith.constant 0 : index
    %c0_3 = arith.constant 0 : index
    %3 = vector.load %arg2[%c0_2, %c0_3] : memref<128x384xbf16, #tpu.memory_space<vmem>>, vector<128x384xbf16>
    %cst = arith.constant dense<0.000000e+00> : vector<8x384xf32>
    %4 = tpu.matmul %2, %3, %cst {dimension_numbers = #tpu.dot_dimension_numbers<[1], [0], [0], [1], [0, 0, 1, 1], [], []>} : vector<8x128xbf16>, vector<128x384xbf16>, vector<8x384xf32> -> vector<8x384xf32>
    %c0_4 = arith.constant 0 : index
    %c0_5 = arith.constant 0 : index
    %5 = vector.load %arg3[%c0_4, %c0_5] : memref<1x384xf32, #tpu.memory_space<vmem>>, vector<1x384xf32>
    %6 = vector.broadcast %5 : vector<1x384xf32> to vector<8x384xf32>
    %7 = arith.addf %4, %6 : vector<8x384xf32>
    %c0_6 = arith.constant 0 : index
    %c0_7 = arith.constant 0 : index
    %8 = vector.load %arg4[%c0_6, %c0_7] : memref<128x128xbf16, #tpu.memory_space<vmem>>, vector<128x128xbf16>
    %cst_8 = arith.constant 0.000000e+00 : f32
    %9 = vector.broadcast %cst_8 : f32 to vector<8x128xf32>
    %10 = vector.extract_strided_slice %7 {offsets = [0, 0], sizes = [8, 32], strides = [1, 1]} : vector<8x384xf32> to vector<8x32xf32>
    %11 = vector.shape_cast %10 : vector<8x32xf32> to vector<1x8x32xf32>
    %12 = arith.truncf %11 : vector<1x8x32xf32> to vector<1x8x32xbf16>
    %13 = vector.extract_strided_slice %7 {offsets = [0, 128], sizes = [8, 32], strides = [1, 1]} : vector<8x384xf32> to vector<8x32xf32>
    %14 = vector.shape_cast %13 : vector<8x32xf32> to vector<1x8x32xf32>
    %15 = arith.truncf %14 : vector<1x8x32xf32> to vector<1x8x32xbf16>
    %16 = vector.extract_strided_slice %7 {offsets = [0, 256], sizes = [8, 32], strides = [1, 1]} : vector<8x384xf32> to vector<8x32xf32>
    %17 = vector.shape_cast %16 : vector<8x32xf32> to vector<1x8x32xf32>
    %18 = arith.truncf %17 : vector<1x8x32xf32> to vector<1x8x32xbf16>
    %cst_9 = arith.constant dense<0.000000e+00> : vector<1x8x8xf32>
    %19 = tpu.matmul %12, %15, %cst_9 {dimension_numbers = #tpu.dot_dimension_numbers<[2], [2], [1], [1], [0, 0, 0, 1, 1, 1], [0], [0]>} : vector<1x8x32xbf16>, vector<1x8x32xbf16>, vector<1x8x8xf32> -> vector<1x8x8xf32>
    %cst_10 = arith.constant dense<0xFF800000> : vector<1x8xf32>
    %20 = vector.multi_reduction <maximumf>, %19, %cst_10 [2] : vector<1x8x8xf32> to vector<1x8xf32>
    %21 = vector.shape_cast %20 : vector<1x8xf32> to vector<1x8x1xf32>
    %22 = vector.broadcast %21 : vector<1x8x1xf32> to vector<1x8x8xf32>
    %23 = arith.subf %19, %22 : vector<1x8x8xf32>
    %24 = math.exp %23 : vector<1x8x8xf32>
    %cst_11 = arith.constant dense<0.000000e+00> : vector<1x8xf32>
    %25 = vector.multi_reduction <add>, %24, %cst_11 [2] : vector<1x8x8xf32> to vector<1x8xf32>
    %26 = vector.shape_cast %25 : vector<1x8xf32> to vector<1x8x1xf32>
    %27 = arith.truncf %24 : vector<1x8x8xf32> to vector<1x8x8xbf16>
    %cst_12 = arith.constant dense<0.000000e+00> : vector<1x8x32xf32>
    %28 = tpu.matmul %27, %18, %cst_12 {dimension_numbers = #tpu.dot_dimension_numbers<[2], [1], [1], [2], [0, 0, 0, 1, 1, 2], [0], [0]>} : vector<1x8x8xbf16>, vector<1x8x32xbf16>, vector<1x8x32xf32> -> vector<1x8x32xf32>
    %29 = tpu.reciprocal %26 {approx = true} : vector<1x8x1xf32> -> vector<1x8x1xf32>
    %30 = vector.broadcast %29 : vector<1x8x1xf32> to vector<1x8x32xf32>
    %31 = arith.mulf %28, %30 : vector<1x8x32xf32>
    %32 = vector.shape_cast %31 : vector<1x8x32xf32> to vector<8x32xf32>
    %33 = arith.truncf %32 : vector<8x32xf32> to vector<8x32xbf16>
    %34 = vector.extract_strided_slice %8 {offsets = [0, 0], sizes = [32, 128], strides = [1, 1]} : vector<128x128xbf16> to vector<32x128xbf16>
    %cst_13 = arith.constant dense<0.000000e+00> : vector<8x128xf32>
    %35 = tpu.matmul %33, %34, %cst_13 {dimension_numbers = #tpu.dot_dimension_numbers<[1], [0], [0], [1], [0, 0, 1, 1], [], []>} : vector<8x32xbf16>, vector<32x128xbf16>, vector<8x128xf32> -> vector<8x128xf32>
    %36 = arith.addf %9, %35 : vector<8x128xf32>
    %37 = vector.extract_strided_slice %7 {offsets = [0, 32], sizes = [8, 32], strides = [1, 1]} : vector<8x384xf32> to vector<8x32xf32>
    %38 = vector.shape_cast %37 : vector<8x32xf32> to vector<1x8x32xf32>
    %39 = arith.truncf %38 : vector<1x8x32xf32> to vector<1x8x32xbf16>
    %40 = vector.extract_strided_slice %7 {offsets = [0, 160], sizes = [8, 32], strides = [1, 1]} : vector<8x384xf32> to vector<8x32xf32>
    %41 = vector.shape_cast %40 : vector<8x32xf32> to vector<1x8x32xf32>
    %42 = arith.truncf %41 : vector<1x8x32xf32> to vector<1x8x32xbf16>
    %43 = vector.extract_strided_slice %7 {offsets = [0, 288], sizes = [8, 32], strides = [1, 1]} : vector<8x384xf32> to vector<8x32xf32>
    %44 = vector.shape_cast %43 : vector<8x32xf32> to vector<1x8x32xf32>
    %45 = arith.truncf %44 : vector<1x8x32xf32> to vector<1x8x32xbf16>
    %cst_14 = arith.constant dense<0.000000e+00> : vector<1x8x8xf32>
    %46 = tpu.matmul %39, %42, %cst_14 {dimension_numbers = #tpu.dot_dimension_numbers<[2], [2], [1], [1], [0, 0, 0, 1, 1, 1], [0], [0]>} : vector<1x8x32xbf16>, vector<1x8x32xbf16>, vector<1x8x8xf32> -> vector<1x8x8xf32>
    %cst_15 = arith.constant dense<0xFF800000> : vector<1x8xf32>
    %47 = vector.multi_reduction <maximumf>, %46, %cst_15 [2] : vector<1x8x8xf32> to vector<1x8xf32>
    %48 = vector.shape_cast %47 : vector<1x8xf32> to vector<1x8x1xf32>
    %49 = vector.broadcast %48 : vector<1x8x1xf32> to vector<1x8x8xf32>
    %50 = arith.subf %46, %49 : vector<1x8x8xf32>
    %51 = math.exp %50 : vector<1x8x8xf32>
    %cst_16 = arith.constant dense<0.000000e+00> : vector<1x8xf32>
    %52 = vector.multi_reduction <add>, %51, %cst_16 [2] : vector<1x8x8xf32> to vector<1x8xf32>
    %53 = vector.shape_cast %52 : vector<1x8xf32> to vector<1x8x1xf32>
    %54 = arith.truncf %51 : vector<1x8x8xf32> to vector<1x8x8xbf16>
    %cst_17 = arith.constant dense<0.000000e+00> : vector<1x8x32xf32>
    %55 = tpu.matmul %54, %45, %cst_17 {dimension_numbers = #tpu.dot_dimension_numbers<[2], [1], [1], [2], [0, 0, 0, 1, 1, 2], [0], [0]>} : vector<1x8x8xbf16>, vector<1x8x32xbf16>, vector<1x8x32xf32> -> vector<1x8x32xf32>
    %56 = tpu.reciprocal %53 {approx = true} : vector<1x8x1xf32> -> vector<1x8x1xf32>
    %57 = vector.broadcast %56 : vector<1x8x1xf32> to vector<1x8x32xf32>
    %58 = arith.mulf %55, %57 : vector<1x8x32xf32>
    %59 = vector.shape_cast %58 : vector<1x8x32xf32> to vector<8x32xf32>
    %60 = arith.truncf %59 : vector<8x32xf32> to vector<8x32xbf16>
    %61 = vector.extract_strided_slice %8 {offsets = [32, 0], sizes = [32, 128], strides = [1, 1]} : vector<128x128xbf16> to vector<32x128xbf16>
    %cst_18 = arith.constant dense<0.000000e+00> : vector<8x128xf32>
    %62 = tpu.matmul %60, %61, %cst_18 {dimension_numbers = #tpu.dot_dimension_numbers<[1], [0], [0], [1], [0, 0, 1, 1], [], []>} : vector<8x32xbf16>, vector<32x128xbf16>, vector<8x128xf32> -> vector<8x128xf32>
    %63 = arith.addf %36, %62 : vector<8x128xf32>
    %64 = vector.extract_strided_slice %7 {offsets = [0, 64], sizes = [8, 32], strides = [1, 1]} : vector<8x384xf32> to vector<8x32xf32>
    %65 = vector.shape_cast %64 : vector<8x32xf32> to vector<1x8x32xf32>
    %66 = arith.truncf %65 : vector<1x8x32xf32> to vector<1x8x32xbf16>
    %67 = vector.extract_strided_slice %7 {offsets = [0, 192], sizes = [8, 32], strides = [1, 1]} : vector<8x384xf32> to vector<8x32xf32>
    %68 = vector.shape_cast %67 : vector<8x32xf32> to vector<1x8x32xf32>
    %69 = arith.truncf %68 : vector<1x8x32xf32> to vector<1x8x32xbf16>
    %70 = vector.extract_strided_slice %7 {offsets = [0, 320], sizes = [8, 32], strides = [1, 1]} : vector<8x384xf32> to vector<8x32xf32>
    %71 = vector.shape_cast %70 : vector<8x32xf32> to vector<1x8x32xf32>
    %72 = arith.truncf %71 : vector<1x8x32xf32> to vector<1x8x32xbf16>
    %cst_19 = arith.constant dense<0.000000e+00> : vector<1x8x8xf32>
    %73 = tpu.matmul %66, %69, %cst_19 {dimension_numbers = #tpu.dot_dimension_numbers<[2], [2], [1], [1], [0, 0, 0, 1, 1, 1], [0], [0]>} : vector<1x8x32xbf16>, vector<1x8x32xbf16>, vector<1x8x8xf32> -> vector<1x8x8xf32>
    %cst_20 = arith.constant dense<0xFF800000> : vector<1x8xf32>
    %74 = vector.multi_reduction <maximumf>, %73, %cst_20 [2] : vector<1x8x8xf32> to vector<1x8xf32>
    %75 = vector.shape_cast %74 : vector<1x8xf32> to vector<1x8x1xf32>
    %76 = vector.broadcast %75 : vector<1x8x1xf32> to vector<1x8x8xf32>
    %77 = arith.subf %73, %76 : vector<1x8x8xf32>
    %78 = math.exp %77 : vector<1x8x8xf32>
    %cst_21 = arith.constant dense<0.000000e+00> : vector<1x8xf32>
    %79 = vector.multi_reduction <add>, %78, %cst_21 [2] : vector<1x8x8xf32> to vector<1x8xf32>
    %80 = vector.shape_cast %79 : vector<1x8xf32> to vector<1x8x1xf32>
    %81 = arith.truncf %78 : vector<1x8x8xf32> to vector<1x8x8xbf16>
    %cst_22 = arith.constant dense<0.000000e+00> : vector<1x8x32xf32>
    %82 = tpu.matmul %81, %72, %cst_22 {dimension_numbers = #tpu.dot_dimension_numbers<[2], [1], [1], [2], [0, 0, 0, 1, 1, 2], [0], [0]>} : vector<1x8x8xbf16>, vector<1x8x32xbf16>, vector<1x8x32xf32> -> vector<1x8x32xf32>
    %83 = tpu.reciprocal %80 {approx = true} : vector<1x8x1xf32> -> vector<1x8x1xf32>
    %84 = vector.broadcast %83 : vector<1x8x1xf32> to vector<1x8x32xf32>
    %85 = arith.mulf %82, %84 : vector<1x8x32xf32>
    %86 = vector.shape_cast %85 : vector<1x8x32xf32> to vector<8x32xf32>
    %87 = arith.truncf %86 : vector<8x32xf32> to vector<8x32xbf16>
    %88 = vector.extract_strided_slice %8 {offsets = [64, 0], sizes = [32, 128], strides = [1, 1]} : vector<128x128xbf16> to vector<32x128xbf16>
    %cst_23 = arith.constant dense<0.000000e+00> : vector<8x128xf32>
    %89 = tpu.matmul %87, %88, %cst_23 {dimension_numbers = #tpu.dot_dimension_numbers<[1], [0], [0], [1], [0, 0, 1, 1], [], []>} : vector<8x32xbf16>, vector<32x128xbf16>, vector<8x128xf32> -> vector<8x128xf32>
    %90 = arith.addf %63, %89 : vector<8x128xf32>
    %91 = vector.extract_strided_slice %7 {offsets = [0, 96], sizes = [8, 32], strides = [1, 1]} : vector<8x384xf32> to vector<8x32xf32>
    %92 = vector.shape_cast %91 : vector<8x32xf32> to vector<1x8x32xf32>
    %93 = arith.truncf %92 : vector<1x8x32xf32> to vector<1x8x32xbf16>
    %94 = vector.extract_strided_slice %7 {offsets = [0, 224], sizes = [8, 32], strides = [1, 1]} : vector<8x384xf32> to vector<8x32xf32>
    %95 = vector.shape_cast %94 : vector<8x32xf32> to vector<1x8x32xf32>
    %96 = arith.truncf %95 : vector<1x8x32xf32> to vector<1x8x32xbf16>
    %97 = vector.extract_strided_slice %7 {offsets = [0, 352], sizes = [8, 32], strides = [1, 1]} : vector<8x384xf32> to vector<8x32xf32>
    %98 = vector.shape_cast %97 : vector<8x32xf32> to vector<1x8x32xf32>
    %99 = arith.truncf %98 : vector<1x8x32xf32> to vector<1x8x32xbf16>
    %cst_24 = arith.constant dense<0.000000e+00> : vector<1x8x8xf32>
    %100 = tpu.matmul %93, %96, %cst_24 {dimension_numbers = #tpu.dot_dimension_numbers<[2], [2], [1], [1], [0, 0, 0, 1, 1, 1], [0], [0]>} : vector<1x8x32xbf16>, vector<1x8x32xbf16>, vector<1x8x8xf32> -> vector<1x8x8xf32>
    %cst_25 = arith.constant dense<0xFF800000> : vector<1x8xf32>
    %101 = vector.multi_reduction <maximumf>, %100, %cst_25 [2] : vector<1x8x8xf32> to vector<1x8xf32>
    %102 = vector.shape_cast %101 : vector<1x8xf32> to vector<1x8x1xf32>
    %103 = vector.broadcast %102 : vector<1x8x1xf32> to vector<1x8x8xf32>
    %104 = arith.subf %100, %103 : vector<1x8x8xf32>
    %105 = math.exp %104 : vector<1x8x8xf32>
    %cst_26 = arith.constant dense<0.000000e+00> : vector<1x8xf32>
    %106 = vector.multi_reduction <add>, %105, %cst_26 [2] : vector<1x8x8xf32> to vector<1x8xf32>
    %107 = vector.shape_cast %106 : vector<1x8xf32> to vector<1x8x1xf32>
    %108 = arith.truncf %105 : vector<1x8x8xf32> to vector<1x8x8xbf16>
    %cst_27 = arith.constant dense<0.000000e+00> : vector<1x8x32xf32>
    %109 = tpu.matmul %108, %99, %cst_27 {dimension_numbers = #tpu.dot_dimension_numbers<[2], [1], [1], [2], [0, 0, 0, 1, 1, 2], [0], [0]>} : vector<1x8x8xbf16>, vector<1x8x32xbf16>, vector<1x8x32xf32> -> vector<1x8x32xf32>
    %110 = tpu.reciprocal %107 {approx = true} : vector<1x8x1xf32> -> vector<1x8x1xf32>
    %111 = vector.broadcast %110 : vector<1x8x1xf32> to vector<1x8x32xf32>
    %112 = arith.mulf %109, %111 : vector<1x8x32xf32>
    %113 = vector.shape_cast %112 : vector<1x8x32xf32> to vector<8x32xf32>
    %114 = arith.truncf %113 : vector<8x32xf32> to vector<8x32xbf16>
    %115 = vector.extract_strided_slice %8 {offsets = [96, 0], sizes = [32, 128], strides = [1, 1]} : vector<128x128xbf16> to vector<32x128xbf16>
    %cst_28 = arith.constant dense<0.000000e+00> : vector<8x128xf32>
    %116 = tpu.matmul %114, %115, %cst_28 {dimension_numbers = #tpu.dot_dimension_numbers<[1], [0], [0], [1], [0, 0, 1, 1], [], []>} : vector<8x32xbf16>, vector<32x128xbf16>, vector<8x128xf32> -> vector<8x128xf32>
    %117 = arith.addf %90, %116 : vector<8x128xf32>
    %c0_29 = arith.constant 0 : index
    %c0_30 = arith.constant 0 : index
    %118 = vector.load %arg5[%c0_29, %c0_30] : memref<1x128xf32, #tpu.memory_space<vmem>>, vector<1x128xf32>
    %119 = vector.broadcast %118 : vector<1x128xf32> to vector<8x128xf32>
    %120 = arith.addf %117, %119 : vector<8x128xf32>
    %121 = vector.shape_cast %120 : vector<8x128xf32> to vector<1x8x128xf32>
    %c0_31 = arith.constant 0 : index
    %c0_32 = arith.constant 0 : index
    %c0_33 = arith.constant 0 : index
    %122 = vector.load %arg6[%c0_31, %c0_32, %c0_33] : memref<1x8x128xf32, #tpu.memory_space<vmem>>, vector<1x8x128xf32>
    tpu.vector_store %arg6[%c0_31, %c0_32, %c0_33], %121 {strides = array<i32>} : memref<1x8x128xf32, #tpu.memory_space<vmem>>, vector<1x8x128xf32>,
    return
  }
  func.func @transform_0(%arg0: i32) -> (i32, i32, i32) {
    %c0_i32 = arith.constant 0 : i32
    %c0_i32_0 = arith.constant 0 : i32
    %c0_i32_1 = arith.constant 0 : i32
    return %arg0, %c0_i32, %c0_i32_0 : i32, i32, i32
  }
  func.func @transform_1(%arg0: i32) -> (i32, i32) {
    %c0_i32 = arith.constant 0 : i32
    %c0_i32_0 = arith.constant 0 : i32
    %c0_i32_1 = arith.constant 0 : i32
    return %c0_i32, %c0_i32_0 : i32, i32
  }
  func.func @transform_2(%arg0: i32) -> (i32, i32) {
    %c0_i32 = arith.constant 0 : i32
    %c0_i32_0 = arith.constant 0 : i32
    %c0_i32_1 = arith.constant 0 : i32
    return %c0_i32, %c0_i32_0 : i32, i32
  }
  func.func @transform_3(%arg0: i32) -> (i32, i32) {
    %c0_i32 = arith.constant 0 : i32
    %c0_i32_0 = arith.constant 0 : i32
    %c0_i32_1 = arith.constant 0 : i32
    return %c0_i32, %c0_i32_0 : i32, i32
  }
  func.func @transform_4(%arg0: i32) -> (i32, i32) {
    %c0_i32 = arith.constant 0 : i32
    %c0_i32_0 = arith.constant 0 : i32
    %c0_i32_1 = arith.constant 0 : i32
    return %c0_i32, %c0_i32_0 : i32, i32
  }
  func.func @transform_5(%arg0: i32) -> (i32, i32, i32) {
    %c0_i32 = arith.constant 0 : i32
    %c0_i32_0 = arith.constant 0 : i32
    %c0_i32_1 = arith.constant 0 : i32
    return %arg0, %c0_i32, %c0_i32_0 : i32, i32, i32
  }
}

</mosaic_0001>

<llo_original>
// kernel: tpu_custom_call.1
$region0: #{tpu_custom_call.1}
  #allocation0 [shape = 'u32[]', space=smem, size = 0x4, offset = 0x4, fixed_abs, tag = 'smem constant byte address 0x4 - core index']
  #allocation1 [shape = 'u32[144,128]{1,0:T(1,128)}', space=vmem, size = 0x12000, scoped, tag = 'internal scratch']
  %s0 = inlined_call_operand.hbm [shape: f32[2,8,128], index: 0, kind: input, shape index: {}]
  %s1 = inlined_call_operand.hbm [shape: bf16[128,384], index: 1, kind: input, shape index: {}]
  %s2 = inlined_call_operand.vmem [shape: f32[1,384], index: 2, kind: input, shape index: {}]
  %s3 = inlined_call_operand.hbm [shape: bf16[128,128], index: 3, kind: input, shape index: {}]
  %s4 = inlined_call_operand.vmem [shape: f32[1,128], index: 4, kind: input, shape index: {}]
  %s5 = inlined_call_operand.hbm [shape: f32[2,8,128], index: 5, kind: output, shape index: {}]
  %s6 = sld [smem:[#allocation0]]
  $region65: #{tpu_custom_call.1} parent=0
    _
  %s8 = ssub.s32 1, %s6
  %s9 = scalar_select 0, %s8, %s6
  $region1: #{tpu_custom_call.1} parent=0
    #allocation2 [shape = 'u8[8192]{0}', space=vmem, size = 0x2000, scoped, tag = 'input window, operand 0']
    #allocation3 [shape = 's32[2]{0}', space=sflag, size = 0x8, scoped, tag = 'scoped memory for tpu_custom_call.1']
    #allocation4 [shape = 's32[2]{0}', space=sflag, size = 0x8, scoped, tag = 'scoped memory for tpu_custom_call.1']
    #allocation5 [shape = 'u8[98304]{0}', space=vmem, size = 0x18000, scoped, tag = 'input window, operand 1, single buffered']
    #allocation6 [shape = 's32[1]{0}', space=sflag, size = 0x4, scoped, tag = 'scoped memory for tpu_custom_call.1']
    #allocation7 [shape = 'u8[32768]{0}', space=vmem, size = 0x8000, scoped, tag = 'input window, operand 3, single buffered']
    #allocation8 [shape = 'u8[8192]{0}', space=vmem, size = 0x2000, scoped, tag = 'output window, operand 0']
    %10 = vsyncpa [#allocation3], 0
    %s11 = scalar_lea.sflag [#allocation3], 1
    %12 = vsyncpa %s11, 0
    %13 = vsyncpa [#allocation6], 0
    %14 = vsyncpa [#allocation4], 0
    %s15 = scalar_lea.sflag [#allocation4], 1
    %16 = vsyncpa %s15, 0
    loop: start=0, step=1, limit=4
    $region2: #{tpu_custom_call.1} parent=1 // loop_pre_header
      _
    $region3: #{tpu_custom_call.1} parent=1 // loop_header
      %s18 = sphi 0, %s22
      %p19 = scmp.ge.s32.totalorder %s18, 4
      %s28 = sphi 0, %s30
      %s31 = sphi 0, %s28
      %s32 = sphi 0, %s31
      %s48 = sphi 0, %s32
      %s52 = sphi 0, %s52
      %s54 = sphi 0, %s52
      %s55 = sphi 0, %s54
      %s69 = sphi 0, %s55
      %s73 = sphi 0, %s73
      %s75 = sphi 0, %s73
      %s76 = sphi 0, %s75
      %s90 = sphi 0, %s76
      %s94 = sphi 0, %s94
      %s96 = sphi 0, %s94
      %s97 = sphi 0, %s96
      %s111 = sphi 0, %s97
      %s115 = sphi 0, %s115
      %s117 = sphi 0, %s115
      %s118 = sphi 0, %s117
      %s132 = sphi 0, %s118
      %s138 = sphi 0, %s140
      %s141 = sphi 0, %s138
      %s142 = sphi 0, %s141
      %s158 = sphi 0, %s142
    $region4: #{tpu_custom_call.1} parent=1 // loop_header_branch
      %21 = sbr.rel (%p19) target = $region8
    $region5: #{tpu_custom_call.1} parent=1 // loop_body
      %s23 = ssub.s32 %s18, 1
      %s24 = ssub.s32 %s18, 2
      %s25 = sadd.s32 %s18, 1
      %s26 = ssub.s32 %s18, %s25
      %p27 = scmp.eq.s32.totalorder %s26, 0
      %s29 = sadd.s32 %s28, 1
      %s30 = scalar_select %p27, %s28, %s29
      %p33 = pneg %p27
      %p34 = scmp.eq.s32.totalorder %s18, 1
      %p35 = por %p33, %p34
      %p36 = scmp.ne.s32.totalorder %s28, %s31
      %p37 = scmp.eq.s32.totalorder %s18, 0
      %p38 = por %p36, %p37
      %p39 = scmp.ne.s32.totalorder %s28, %s31
      %p40 = scmp.eq.s32.totalorder %s23, 1
      %p41 = por %p39, %p40
      %p42 = scmp.ne.s32.totalorder %s31, %s32
      %p43 = scmp.eq.s32.totalorder %s23, 0
      %p44 = por %p42, %p43
      %p45 = scmp.ne.s32.totalorder %s31, %s32
      %p46 = scmp.eq.s32.totalorder %s24, 1
      %p47 = por %p45, %p46
      %p49 = scmp.ne.s32.totalorder %s32, %s48
      %p50 = scmp.eq.s32.totalorder %s24, 0
      %p51 = por %p49, %p50
      %s53 = sadd.s32 %s52, 1
      %p56 = scmp.eq.s32.totalorder %s18, 1
      %p57 = scmp.ne.s32.totalorder %s52, %s54
      %p58 = scmp.eq.s32.totalorder %s18, 0
      %p59 = por %p57, %p58
      %p60 = scmp.ne.s32.totalorder %s52, %s54
      %p61 = scmp.eq.s32.totalorder %s23, 1
      %p62 = por %p60, %p61
      %p63 = scmp.ne.s32.totalorder %s54, %s55
      %p64 = scmp.eq.s32.totalorder %s23, 0
      %p65 = por %p63, %p64
      %p66 = scmp.ne.s32.totalorder %s54, %s55
      %p67 = scmp.eq.s32.totalorder %s24, 1
      %p68 = por %p66, %p67
      %p70 = scmp.ne.s32.totalorder %s55, %s69
      %p71 = scmp.eq.s32.totalorder %s24, 0
      %p72 = por %p70, %p71
      %s74 = sadd.s32 %s73, 1
      %p77 = scmp.eq.s32.totalorder %s18, 1
      %p78 = scmp.ne.s32.totalorder %s73, %s75
      %p79 = scmp.eq.s32.totalorder %s18, 0
      %p80 = por %p78, %p79
      %p81 = scmp.ne.s32.totalorder %s73, %s75
      %p82 = scmp.eq.s32.totalorder %s23, 1
      %p83 = por %p81, %p82
      %p84 = scmp.ne.s32.totalorder %s75, %s76
      %p85 = scmp.eq.s32.totalorder %s23, 0
      %p86 = por %p84, %p85
      %p87 = scmp.ne.s32.totalorder %s75, %s76
      %p88 = scmp.eq.s32.totalorder %s24, 1
      %p89 = por %p87, %p88
      %p91 = scmp.ne.s32.totalorder %s76, %s90
      %p92 = scmp.eq.s32.totalorder %s24, 0
      %p93 = por %p91, %p92
      %s95 = sadd.s32 %s94, 1
      %p98 = scmp.eq.s32.totalorder %s18, 1
      %p99 = scmp.ne.s32.totalorder %s94, %s96
      %p100 = scmp.eq.s32.totalorder %s18, 0
      %p101 = por %p99, %p100
      %p102 = scmp.ne.s32.totalorder %s94, %s96
      %p103 = scmp.eq.s32.totalorder %s23, 1
      %p104 = por %p102, %p103
      %p105 = scmp.ne.s32.totalorder %s96, %s97
      %p106 = scmp.eq.s32.totalorder %s23, 0
      %p107 = por %p105, %p106
      %p108 = scmp.ne.s32.totalorder %s96, %s97
      %p109 = scmp.eq.s32.totalorder %s24, 1
      %p110 = por %p108, %p109
      %p112 = scmp.ne.s32.totalorder %s97, %s111
      %p113 = scmp.eq.s32.totalorder %s24, 0
      %p114 = por %p112, %p113
      %s116 = sadd.s32 %s115, 1
      %p119 = scmp.eq.s32.totalorder %s18, 1
      %p120 = scmp.ne.s32.totalorder %s115, %s117
      %p121 = scmp.eq.s32.totalorder %s18, 0
      %p122 = por %p120, %p121
      %p123 = scmp.ne.s32.totalorder %s115, %s117
      %p124 = scmp.eq.s32.totalorder %s23, 1
      %p125 = por %p123, %p124
      %p126 = scmp.ne.s32.totalorder %s117, %s118
      %p127 = scmp.eq.s32.totalorder %s23, 0
      %p128 = por %p126, %p127
      %p129 = scmp.ne.s32.totalorder %s117, %s118
      %p130 = scmp.eq.s32.totalorder %s24, 1
      %p131 = por %p129, %p130
      %p133 = scmp.ne.s32.totalorder %s118, %s132
      %p134 = scmp.eq.s32.totalorder %s24, 0
      %p135 = por %p133, %p134
      %s136 = ssub.s32 %s18, %s25
      %p137 = scmp.eq.s32.totalorder %s136, 0
      %s139 = sadd.s32 %s138, 1
      %s140 = scalar_select %p137, %s138, %s139
      %p143 = pneg %p137
      %p144 = scmp.eq.s32.totalorder %s18, 1
      %p145 = por %p143, %p144
      %p146 = scmp.ne.s32.totalorder %s138, %s141
      %p147 = scmp.eq.s32.totalorder %s18, 0
      %p148 = por %p146, %p147
      %p149 = scmp.ne.s32.totalorder %s138, %s141
      %p150 = scmp.eq.s32.totalorder %s23, 1
      %p151 = por %p149, %p150
      %p152 = scmp.ne.s32.totalorder %s141, %s142
      %p153 = scmp.eq.s32.totalorder %s23, 0
      %p154 = por %p152, %p153
      %p155 = scmp.ne.s32.totalorder %s141, %s142
      %p156 = scmp.eq.s32.totalorder %s24, 1
      %p157 = por %p155, %p156
      %p159 = scmp.ne.s32.totalorder %s142, %s158
      %p160 = scmp.eq.s32.totalorder %s24, 0
      %p161 = por %p159, %p160
      %p162 = scmp.le.s32.totalorder 1, %s18
      %p163 = scmp.lt.s32.totalorder %s18, 3
      %p164 = pnand %p162, %p163
      %p165 = pneg %p164
      // Predicated region
      $region9: #{tpu_custom_call.1} parent=5 // pred_check
        _
      $region10: #{tpu_custom_call.1} parent=5 // pred_check_branch
        %167 = sbr.rel (%p164) target = $region12
      $region11: #{tpu_custom_call.1} parent=5 // pred_region
        %s168 = ssub.s32 %s18, 1
        // Predicated region
        $region13: #{tpu_custom_call.1} parent=11 // pred_check
          %p169 = pneg %p65
        $region14: #{tpu_custom_call.1} parent=11 // pred_check_branch
          %171 = sbr.rel (%p169) target = $region16
        $region15: #{tpu_custom_call.1} parent=11 // pred_region
          %s173 = ssub.s32 3072, 3072
          %174 = vsyncadd [#allocation6], %s173
          %s175 = sshll.u32 [#allocation5], 4
          %s176 = int_to_ptr.vmem [resolvable:$true] %s175
          %181 = dma.hbm_to_vmem [thread:$0]  %s1, 3072, %s176, [#allocation6], 192, 192, 12
        $region16: #{tpu_custom_call.1} parent=11 // pred_fallthru
          _
        // Predicated region
        $region17: #{tpu_custom_call.1} parent=11 // pred_check
          %p182 = pneg %p86
        $region18: #{tpu_custom_call.1} parent=11 // pred_check_branch
          %184 = sbr.rel (%p182) target = $region20
        $region19: #{tpu_custom_call.1} parent=11 // pred_region
          _
        $region20: #{tpu_custom_call.1} parent=11 // pred_fallthru
          _
        // Predicated region
        $region21: #{tpu_custom_call.1} parent=11 // pred_check
          %p185 = pneg %p107
        $region22: #{tpu_custom_call.1} parent=11 // pred_check_branch
          %187 = sbr.rel (%p185) target = $region24
        $region23: #{tpu_custom_call.1} parent=11 // pred_region
          %s189 = ssub.s32 1024, 1024
          %190 = vsyncadd [#allocation6], %s189
          %s191 = sshll.u32 [#allocation7], 4
          %s192 = int_to_ptr.vmem [resolvable:$true] %s191
          %197 = dma.hbm_to_vmem [thread:$0]  %s3, 1024, %s192, [#allocation6], 64, 64, 4
        $region24: #{tpu_custom_call.1} parent=11 // pred_fallthru
          _
        // Predicated region
        $region25: #{tpu_custom_call.1} parent=11 // pred_check
          %p198 = pneg %p128
        $region26: #{tpu_custom_call.1} parent=11 // pred_check_branch
          %200 = sbr.rel (%p198) target = $region28
        $region27: #{tpu_custom_call.1} parent=11 // pred_region
          _
        $region28: #{tpu_custom_call.1} parent=11 // pred_fallthru
          _
      $region12: #{tpu_custom_call.1} parent=5 // pred_fallthru
        _
      %p201 = scmp.lt.s32.totalorder %s18, 2
      // Predicated region
      $region29: #{tpu_custom_call.1} parent=5 // pred_check
        %p202 = pneg %p201
      $region30: #{tpu_custom_call.1} parent=5 // pred_check_branch
        %204 = sbr.rel (%p202) target = $region32
      $region31: #{tpu_custom_call.1} parent=5 // pred_region
        // Predicated region
        $region33: #{tpu_custom_call.1} parent=31 // pred_check
          %p205 = pneg %p38
        $region34: #{tpu_custom_call.1} parent=31 // pred_check_branch
          %207 = sbr.rel (%p205) target = $region36
        $region35: #{tpu_custom_call.1} parent=31 // pred_region
          %s208 = sand.u32 %s28, 1
          %s209 = scalar_lea.sflag [#allocation3], %s208
          %s210 = sand.u32 %s28, 1
          %s211 = smul.addr %s210, 8
          %s212 = scalar_lea.vmem [#allocation2], %s211
          %s214 = ssub.s32 128, 128
          %215 = vsyncadd %s209, %s214
          %s216 = smul.addr %s18, 128
          %s217 = scalar_lea.hbm %s0, %s216
          %s219 = sshll.u32 %s212, 4
          %s220 = int_to_ptr.vmem [resolvable:$true] %s219
          %222 = dma.hbm_to_vmem [thread:$0]  %s217, 128, %s220, %s209
        $region36: #{tpu_custom_call.1} parent=31 // pred_fallthru
          _
      $region32: #{tpu_custom_call.1} parent=5 // pred_fallthru
        _
      %p223 = scmp.le.s32.totalorder 1, %s18
      %p224 = scmp.lt.s32.totalorder %s18, 3
      %p225 = pnand %p223, %p224
      %p226 = pneg %p225
      // Predicated region
      $region37: #{tpu_custom_call.1} parent=5 // pred_check
        _
      $region38: #{tpu_custom_call.1} parent=5 // pred_check_branch
        %228 = sbr.rel (%p225) target = $region40
      $region39: #{tpu_custom_call.1} parent=5 // pred_region
        %s229 = ssub.s32 %s18, 1
        %s230 = sand.u32 %s31, 1
        %s231 = scalar_lea.sflag [#allocation3], %s230
        %s232 = sand.u32 %s31, 1
        %s233 = smul.addr %s232, 8
        %s234 = scalar_lea.vmem [#allocation2], %s233
        // Predicated region
        $region41: #{tpu_custom_call.1} parent=39 // pred_check
          %p235 = pneg %p44
        $region42: #{tpu_custom_call.1} parent=39 // pred_check_branch
          %237 = sbr.rel (%p235) target = $region44
        $region43: #{tpu_custom_call.1} parent=39 // pred_region
          %238 = dma.done %s231, 128
        $region44: #{tpu_custom_call.1} parent=39 // pred_fallthru
          _
        // Predicated region
        $region45: #{tpu_custom_call.1} parent=39 // pred_check
          %p239 = pneg %p65
        $region46: #{tpu_custom_call.1} parent=39 // pred_check_branch
          %241 = sbr.rel (%p239) target = $region48
        $region47: #{tpu_custom_call.1} parent=39 // pred_region
          %242 = dma.done [#allocation6], 3072
        $region48: #{tpu_custom_call.1} parent=39 // pred_fallthru
          _
        // Predicated region
        $region49: #{tpu_custom_call.1} parent=39 // pred_check
          %p243 = pneg %p107
        $region50: #{tpu_custom_call.1} parent=39 // pred_check_branch
          %245 = sbr.rel (%p243) target = $region52
        $region51: #{tpu_custom_call.1} parent=39 // pred_region
          %246 = dma.done [#allocation6], 1024
        $region52: #{tpu_custom_call.1} parent=39 // pred_fallthru
          _
        %s247 = sand.u32 %s31, 1
        %s248 = scalar_lea.sflag [#allocation3], %s247
        %s249 = sand.u32 %s31, 1
        %s250 = smul.addr %s249, 8
        %s251 = scalar_lea.vmem [#allocation2], %s250
        %p252 = pneg %p44
        %p253 = pneg %p41
        %p254 = pneg %p65
        %p255 = pneg %p62
        %p256 = pneg %p86
        %p257 = pneg %p83
        %p258 = pneg %p107
        %p259 = pneg %p104
        %p260 = pneg %p128
        %p261 = pneg %p125
        %p262 = pneg %p154
        %p263 = pneg %p151
        %s264 = sand.u32 %s141, 1
        %s265 = scalar_lea.sflag [#allocation4], %s264
        %s266 = sand.u32 %s141, 1
        %s267 = smul.addr %s266, 8
        %s268 = scalar_lea.vmem [#allocation8], %s267
        %v270 = vld [vmem:[%s234] sm:$0xff]
        %v271 = vpack.c.bf16 %v270, %v270
        %v272 = vld [vmem:[#allocation5] sm:$0xff]
        %v273 = vld [vmem:[#allocation5 + $0x8] sm:$0xf]
        %v274 = vld [vmem:[#allocation5 + $0xc] sm:$0xff]
        %v275 = vld [vmem:[#allocation5 + $0x14] sm:$0xf]
        %v276 = vld [vmem:[#allocation5 + $0x18] sm:$0xff]
        %v277 = vld [vmem:[#allocation5 + $0x20] sm:$0xf]
        %v278 = vld [vmem:[#allocation5 + $0x24] sm:$0xff]
        %v279 = vld [vmem:[#allocation5 + $0x2c] sm:$0xf]
        %v280 = vld [vmem:[#allocation5 + $0x30] sm:$0xff]
        %v281 = vld [vmem:[#allocation5 + $0x38] sm:$0xf]
        %v282 = vld [vmem:[#allocation5 + $0x3c] sm:$0xff]
        %v283 = vld [vmem:[#allocation5 + $0x44] sm:$0xf]
        %v284 = vld [vmem:[#allocation5 + $0x48] sm:$0xff]
        %v285 = vld [vmem:[#allocation5 + $0x50] sm:$0xf]
        %v286 = vld [vmem:[#allocation5 + $0x54] sm:$0xff]
        %v287 = vld [vmem:[#allocation5 + $0x5c] sm:$0xf]
        %v288 = vld [vmem:[#allocation5 + $0x60] sm:$0xff]
        %v289 = vld [vmem:[#allocation5 + $0x68] sm:$0xf]
        %v290 = vld [vmem:[#allocation5 + $0x6c] sm:$0xff]
        %v291 = vld [vmem:[#allocation5 + $0x74] sm:$0xf]
        %v292 = vld [vmem:[#allocation5 + $0x78] sm:$0xff]
        %v293 = vld [vmem:[#allocation5 + $0x80] sm:$0xf]
        %v294 = vld [vmem:[#allocation5 + $0x84] sm:$0xff]
        %v295 = vld [vmem:[#allocation5 + $0x8c] sm:$0xf]
        %v296 = vld [vmem:[#allocation5 + $0x90] sm:$0xff]
        %v297 = vld [vmem:[#allocation5 + $0x98] sm:$0xf]
        %v298 = vld [vmem:[#allocation5 + $0x9c] sm:$0xff]
        %v299 = vld [vmem:[#allocation5 + $0xa4] sm:$0xf]
        %v300 = vld [vmem:[#allocation5 + $0xa8] sm:$0xff]
        %v301 = vld [vmem:[#allocation5 + $0xb0] sm:$0xf]
        %v302 = vld [vmem:[#allocation5 + $0xb4] sm:$0xff]
        %v303 = vld [vmem:[#allocation5 + $0xbc] sm:$0xf]
        %v304 = vld [vmem:[%s2] sm:$0x7]
        %v306 = vlaneseq
        %v307 = vshrl.u32 %v306, 7
        %v308 = vsub.s32 0, %v307
        %v309 = vrot.slane %v304, %v308
        %v310 = vlaneseq
        %v311 = vshrl.u32 %v310, 7
        %v312 = vsub.s32 1, %v311
        %v313 = vrot.slane %v304, %v312
        %v314 = vlaneseq
        %v315 = vshrl.u32 %v314, 7
        %v316 = vsub.s32 2, %v315
        %v317 = vrot.slane %v304, %v316
        %v353 = vunpack.c.l.b16 %v272
        %v354 = vunpack.c.h.b16 %v272
        %v355 = vunpack.c.l.b16 %v273
        %v356 = vunpack.c.l.b16 %v274
        %v357 = vunpack.c.h.b16 %v274
        %v358 = vunpack.c.l.b16 %v275
        %v359 = vunpack.c.l.b16 %v276
        %v360 = vunpack.c.h.b16 %v276
        %v361 = vunpack.c.l.b16 %v277
        %v362 = vunpack.c.l.b16 %v278
        %v363 = vunpack.c.h.b16 %v278
        %v364 = vunpack.c.l.b16 %v279
        %v365 = vunpack.c.l.b16 %v280
        %v366 = vunpack.c.h.b16 %v280
        %v367 = vunpack.c.l.b16 %v281
        %v368 = vunpack.c.l.b16 %v282
        %v369 = vunpack.c.h.b16 %v282
        %v370 = vunpack.c.l.b16 %v283
        %v371 = vunpack.c.l.b16 %v284
        %v372 = vunpack.c.h.b16 %v284
        %v373 = vunpack.c.l.b16 %v285
        %v374 = vunpack.c.l.b16 %v286
        %v375 = vunpack.c.h.b16 %v286
        %v376 = vunpack.c.l.b16 %v287
        %v377 = vunpack.c.l.b16 %v288
        %v378 = vunpack.c.h.b16 %v288
        %v379 = vunpack.c.l.b16 %v289
        %v380 = vunpack.c.l.b16 %v290
        %v381 = vunpack.c.h.b16 %v290
        %v382 = vunpack.c.l.b16 %v291
        %v383 = vunpack.c.l.b16 %v292
        %v384 = vunpack.c.h.b16 %v292
        %v385 = vunpack.c.l.b16 %v293
        %v386 = vunpack.c.l.b16 %v294
        %v387 = vunpack.c.h.b16 %v294
        %v388 = vunpack.c.l.b16 %v295
        %v389 = vunpack.c.l.b16 %v296
        %v390 = vunpack.c.h.b16 %v296
        %v391 = vunpack.c.l.b16 %v297
        %v392 = vunpack.c.l.b16 %v298
        %v393 = vunpack.c.h.b16 %v298
        %v394 = vunpack.c.l.b16 %v299
        %v395 = vunpack.c.l.b16 %v300
        %v396 = vunpack.c.h.b16 %v300
        %v397 = vunpack.c.l.b16 %v301
        %v398 = vunpack.c.l.b16 %v302
        %v399 = vunpack.c.h.b16 %v302
        %v400 = vunpack.c.l.b16 %v303
        %v401 = vpack.c.b16 %v356, %v353
        %v402 = vpack.c.b16 %v357, %v354
        %v403 = vpack.c.b16 %v358, %v355
        %v404 = vpack.c.b16 %v362, %v359
        %v405 = vpack.c.b16 %v363, %v360
        %v406 = vpack.c.b16 %v364, %v361
        %v407 = vpack.c.b16 %v368, %v365
        %v408 = vpack.c.b16 %v369, %v366
        %v409 = vpack.c.b16 %v370, %v367
        %v410 = vpack.c.b16 %v374, %v371
        %v411 = vpack.c.b16 %v375, %v372
        %v412 = vpack.c.b16 %v376, %v373
        %v413 = vpack.c.b16 %v380, %v377
        %v414 = vpack.c.b16 %v381, %v378
        %v415 = vpack.c.b16 %v382, %v379
        %v416 = vpack.c.b16 %v386, %v383
        %v417 = vpack.c.b16 %v387, %v384
        %v418 = vpack.c.b16 %v388, %v385
        %v419 = vpack.c.b16 %v392, %v389
        %v420 = vpack.c.b16 %v393, %v390
        %v421 = vpack.c.b16 %v394, %v391
        %v422 = vpack.c.b16 %v398, %v395
        %v423 = vpack.c.b16 %v399, %v396
        %v424 = vpack.c.b16 %v400, %v397
        %449 = vmatprep.subr.bf16.mxu0 %v402
        %450 = vmatpush1.bf16.msra.mxu0 %v401
        %451 = vmatprep.subr.bf16.mxu0 %v405
        %452 = vmatpush1.bf16.msra.mxu0 %v404
        %453 = vmatprep.subr.bf16.mxu0 %v408
        %454 = vmatpush1.bf16.msra.mxu0 %v407
        %455 = vmatprep.subr.bf16.mxu0 %v411
        %456 = vmatpush1.bf16.msra.mxu0 %v410
        %457 = vmatprep.subr.bf16.mxu0 %v414
        %458 = vmatpush1.bf16.msra.mxu0 %v413
        %459 = vmatprep.subr.bf16.mxu0 %v417
        %460 = vmatpush1.bf16.msra.mxu0 %v416
        %461 = vmatprep.subr.bf16.mxu0 %v420
        %462 = vmatpush1.bf16.msra.mxu0 %v419
        %463 = vmatprep.subr.bf16.mxu0 %v423
        %464 = vmatpush1.bf16.msra.mxu0 %v422
        %465 = vmatprep.subr.bf16.mxu0 0
        %466 = vmatpush1.bf16.msra.mxu0 0
        %467 = vmatprep.subr.bf16.mxu0 0
        %468 = vmatpush1.bf16.msra.mxu0 0
        %469 = vmatprep.subr.bf16.mxu0 0
        %470 = vmatpush1.bf16.msra.mxu0 0
        %471 = vmatprep.subr.bf16.mxu0 0
        %472 = vmatpush1.bf16.msra.mxu0 0
        %473 = vmatprep.subr.bf16.mxu0 0
        %474 = vmatpush1.bf16.msra.mxu0 0
        %475 = vmatprep.subr.bf16.mxu0 0
        %476 = vmatpush1.bf16.msra.mxu0 0
        %477 = vmatprep.subr.bf16.mxu0 0
        %478 = vmatpush1.bf16.msra.mxu0 0
        %479 = vmatprep.subr.bf16.mxu0 0
        %480 = vmatpush1.bf16.msra.mxu0 0
        %481 = vmatprep.mubr.bf16.mxu0 0
        %482 = vmatmul.mubr.bf16.gmra.mrb[0].mxu0 %v271
        %v483 = vpop.f32.mrb[0].mxu0
        %v484 = vadd.f32 %v309, %v483
        %v485 = vpop.f32.mrb[0].mxu0
        %v486 = vadd.f32 %v313, %v485
        %v487 = vpop.f32.mrb[0].mxu0
        %v488 = vpop.f32.mrb[0].mxu0
        %489 = vdwg.mxu0
        %490 = vmatprep.subr.bf16.mxu0 0
        %491 = vmatpush1.bf16.msra.mxu0 %v403
        %492 = vmatprep.subr.bf16.mxu0 0
        %493 = vmatpush1.bf16.msra.mxu0 %v406
        %494 = vmatprep.subr.bf16.mxu0 0
        %495 = vmatpush1.bf16.msra.mxu0 %v409
        %496 = vmatprep.subr.bf16.mxu0 0
        %497 = vmatpush1.bf16.msra.mxu0 %v412
        %498 = vmatprep.subr.bf16.mxu0 0
        %499 = vmatpush1.bf16.msra.mxu0 %v415
        %500 = vmatprep.subr.bf16.mxu0 0
        %501 = vmatpush1.bf16.msra.mxu0 %v418
        %502 = vmatprep.subr.bf16.mxu0 0
        %503 = vmatpush1.bf16.msra.mxu0 %v421
        %504 = vmatprep.subr.bf16.mxu0 0
        %505 = vmatpush1.bf16.msra.mxu0 %v424
        %506 = vmatprep.subr.bf16.mxu0 0
        %507 = vmatpush1.bf16.msra.mxu0 0
        %508 = vmatprep.subr.bf16.mxu0 0
        %509 = vmatpush1.bf16.msra.mxu0 0
        %510 = vmatprep.subr.bf16.mxu0 0
        %511 = vmatpush1.bf16.msra.mxu0 0
        %512 = vmatprep.subr.bf16.mxu0 0
        %513 = vmatpush1.bf16.msra.mxu0 0
        %514 = vmatprep.subr.bf16.mxu0 0
        %515 = vmatpush1.bf16.msra.mxu0 0
        %516 = vmatprep.subr.bf16.mxu0 0
        %517 = vmatpush1.bf16.msra.mxu0 0
        %518 = vmatprep.subr.bf16.mxu0 0
        %519 = vmatpush1.bf16.msra.mxu0 0
        %520 = vmatprep.subr.bf16.mxu0 0
        %521 = vmatpush1.bf16.msra.mxu0 0
        %522 = vmatprep.mubr.bf16.mxu0 0
        %523 = vmatmul.mubr.bf16.gmra.mrb[0].mxu0 %v271
        %v524 = vpop.f32.mrb[0].mxu0
        %v525 = vadd.f32 %v317, %v524
        %v526 = vpop.f32.mrb[0].mxu0
        %v527 = vpop.f32.mrb[0].mxu0
        %v528 = vpop.f32.mrb[0].mxu0
        %529 = vdwg.mxu0
        %v530 = vld [vmem:[#allocation7] sm:$0xf]
        %v531 = vld [vmem:[#allocation7 + $0x4] sm:$0xf]
        %v532 = vld [vmem:[#allocation7 + $0x8] sm:$0xf]
        %v533 = vld [vmem:[#allocation7 + $0xc] sm:$0xf]
        %v534 = vld [vmem:[#allocation7 + $0x10] sm:$0xf]
        %v535 = vld [vmem:[#allocation7 + $0x14] sm:$0xf]
        %v536 = vld [vmem:[#allocation7 + $0x18] sm:$0xf]
        %v537 = vld [vmem:[#allocation7 + $0x1c] sm:$0xf]
        %v538 = vld [vmem:[#allocation7 + $0x20] sm:$0xf]
        %v539 = vld [vmem:[#allocation7 + $0x24] sm:$0xf]
        %v540 = vld [vmem:[#allocation7 + $0x28] sm:$0xf]
        %v541 = vld [vmem:[#allocation7 + $0x2c] sm:$0xf]
        %v542 = vld [vmem:[#allocation7 + $0x30] sm:$0xf]
        %v543 = vld [vmem:[#allocation7 + $0x34] sm:$0xf]
        %v544 = vld [vmem:[#allocation7 + $0x38] sm:$0xf]
        %v545 = vld [vmem:[#allocation7 + $0x3c] sm:$0xf]
        %v546 = vpack.c.bf16 %v484, %v484
        %v547 = vpack.c.bf16 %v486, %v486
        %v548 = vpack.c.bf16 %v525, %v525
        %vm549 = vcmask 261120
        %v551 = vsel %vm549, %v546, 0
        %v554 = vsel %vm549, %v547, 0
        %556 = vmatprep.subr.bf16.mxu0 0
        %557 = vmatpush1.bf16.xpose.msra.mxu0 %v554
        %558 = vmatprep.subr.bf16.mxu0 0
        %559 = vmatpush1.bf16.xpose.msra.mxu0 0
        %560 = vmatprep.subr.bf16.mxu0 0
        %561 = vmatpush1.bf16.xpose.msra.mxu0 0
        %562 = vmatprep.subr.bf16.mxu0 0
        %563 = vmatpush1.bf16.xpose.msra.mxu0 0
        %564 = vmatprep.subr.bf16.mxu0 0
        %565 = vmatpush1.bf16.xpose.msra.mxu0 0
        %566 = vmatprep.subr.bf16.mxu0 0
        %567 = vmatpush1.bf16.xpose.msra.mxu0 0
        %568 = vmatprep.subr.bf16.mxu0 0
        %569 = vmatpush1.bf16.xpose.msra.mxu0 0
        %570 = vmatprep.subr.bf16.mxu0 0
        %571 = vmatpush1.bf16.xpose.msra.mxu0 0
        %572 = vmatprep.subr.bf16.mxu0 0
        %573 = vmatpush1.bf16.xpose.msra.mxu0 0
        %574 = vmatprep.subr.bf16.mxu0 0
        %575 = vmatpush1.bf16.xpose.msra.mxu0 0
        %576 = vmatprep.subr.bf16.mxu0 0
        %577 = vmatpush1.bf16.xpose.msra.mxu0 0
        %578 = vmatprep.subr.bf16.mxu0 0
        %579 = vmatpush1.bf16.xpose.msra.mxu0 0
        %580 = vmatprep.subr.bf16.mxu0 0
        %581 = vmatpush1.bf16.xpose.msra.mxu0 0
        %582 = vmatprep.subr.bf16.mxu0 0
        %583 = vmatpush1.bf16.xpose.msra.mxu0 0
        %584 = vmatprep.subr.bf16.mxu0 0
        %585 = vmatpush1.bf16.xpose.msra.mxu0 0
        %586 = vmatprep.subr.bf16.mxu0 0
        %587 = vmatpush1.bf16.xpose.msra.mxu0 0
        %588 = vmatprep.mubr.bf16.mxu0 0
        %589 = vmatmul.mubr.bf16.gmra.mrb[0].mxu0 %v551
        %v590 = vpop.f32.mrb[0].mxu0
        %v591 = vadd.f32 0.0, %v590
        %v592 = vpop.f32.mrb[0].mxu0
        %v593 = vpop.f32.mrb[0].mxu0
        %v594 = vpop.f32.mrb[0].mxu0
        %595 = vdwg.mxu0
        %vm596 = vcmask 64512
        %v597 = vsel %vm596, %v591, -inf
        %598 = vmax.xlane.f32.xlu0 %v597
        %v599 = vpop.xlane.xlu0 %598
        %v600 = vsub.f32 %v591, %v599
        %v601 = vmul.f32 %v600, 1.442695
        %v602 = vpow.pop %v601
        %v603 = vsel %vm596, %v602, 0.0
        %604 = vadd.xlane.f32.xlu0 %v603
        %v605 = vpop.xlane.xlu0 %604
        %v606 = vpack.c.bf16 %v602, %v602
        %v608 = vsel %vm596, %v606, 0
        %vm610 = vcmask 1043456
        %v612 = vsel %vm610, %v548, 0
        %614 = vmatprep.subr.bf16.mxu0 0
        %615 = vmatpush1.bf16.msra.mxu0 %v612
        %616 = vmatprep.subr.bf16.mxu0 0
        %617 = vmatpush1.bf16.msra.mxu0 0
        %618 = vmatprep.subr.bf16.mxu0 0
        %619 = vmatpush1.bf16.msra.mxu0 0
        %620 = vmatprep.subr.bf16.mxu0 0
        %621 = vmatpush1.bf16.msra.mxu0 0
        %622 = vmatprep.subr.bf16.mxu0 0
        %623 = vmatpush1.bf16.msra.mxu0 0
        %624 = vmatprep.subr.bf16.mxu0 0
        %625 = vmatpush1.bf16.msra.mxu0 0
        %626 = vmatprep.subr.bf16.mxu0 0
        %627 = vmatpush1.bf16.msra.mxu0 0
        %628 = vmatprep.subr.bf16.mxu0 0
        %629 = vmatpush1.bf16.msra.mxu0 0
        %630 = vmatprep.subr.bf16.mxu0 0
        %631 = vmatpush1.bf16.msra.mxu0 0
        %632 = vmatprep.subr.bf16.mxu0 0
        %633 = vmatpush1.bf16.msra.mxu0 0
        %634 = vmatprep.subr.bf16.mxu0 0
        %635 = vmatpush1.bf16.msra.mxu0 0
        %636 = vmatprep.subr.bf16.mxu0 0
        %637 = vmatpush1.bf16.msra.mxu0 0
        %638 = vmatprep.subr.bf16.mxu0 0
        %639 = vmatpush1.bf16.msra.mxu0 0
        %640 = vmatprep.subr.bf16.mxu0 0
        %641 = vmatpush1.bf16.msra.mxu0 0
        %642 = vmatprep.subr.bf16.mxu0 0
        %643 = vmatpush1.bf16.msra.mxu0 0
        %644 = vmatprep.subr.bf16.mxu0 0
        %645 = vmatpush1.bf16.msra.mxu0 0
        %646 = vmatprep.mubr.bf16.mxu0 0
        %647 = vmatmul.mubr.bf16.gmra.mrb[0].mxu0 %v608
        %v648 = vpop.f32.mrb[0].mxu0
        %v649 = vadd.f32 0.0, %v648
        %v650 = vpop.f32.mrb[0].mxu0
        %v651 = vpop.f32.mrb[0].mxu0
        %v652 = vpop.f32.mrb[0].mxu0
        %653 = vdwg.mxu0
        %v654 = vrcp.pop %v605
        %v655 = vmul.f32 %v649, %v654
        %v656 = vpack.c.bf16 %v655, %v655
        %658 = vrot.lane.b32.xlu0 %v546, 96
        %v659 = vpop.permute.xlu0 %658
        %661 = vrot.lane.b32.xlu0 %v547, 96
        %v662 = vpop.permute.xlu0 %661
        %v664 = vsel %vm549, %v659, 0
        %v667 = vsel %vm549, %v662, 0
        %669 = vmatprep.subr.bf16.mxu0 0
        %670 = vmatpush1.bf16.xpose.msra.mxu0 %v667
        %671 = vmatprep.subr.bf16.mxu0 0
        %672 = vmatpush1.bf16.xpose.msra.mxu0 0
        %673 = vmatprep.subr.bf16.mxu0 0
        %674 = vmatpush1.bf16.xpose.msra.mxu0 0
        %675 = vmatprep.subr.bf16.mxu0 0
        %676 = vmatpush1.bf16.xpose.msra.mxu0 0
        %677 = vmatprep.subr.bf16.mxu0 0
        %678 = vmatpush1.bf16.xpose.msra.mxu0 0
        %679 = vmatprep.subr.bf16.mxu0 0
        %680 = vmatpush1.bf16.xpose.msra.mxu0 0
        %681 = vmatprep.subr.bf16.mxu0 0
        %682 = vmatpush1.bf16.xpose.msra.mxu0 0
        %683 = vmatprep.subr.bf16.mxu0 0
        %684 = vmatpush1.bf16.xpose.msra.mxu0 0
        %685 = vmatprep.subr.bf16.mxu0 0
        %686 = vmatpush1.bf16.xpose.msra.mxu0 0
        %687 = vmatprep.subr.bf16.mxu0 0
        %688 = vmatpush1.bf16.xpose.msra.mxu0 0
        %689 = vmatprep.subr.bf16.mxu0 0
        %690 = vmatpush1.bf16.xpose.msra.mxu0 0
        %691 = vmatprep.subr.bf16.mxu0 0
        %692 = vmatpush1.bf16.xpose.msra.mxu0 0
        %693 = vmatprep.subr.bf16.mxu0 0
        %694 = vmatpush1.bf16.xpose.msra.mxu0 0
        %695 = vmatprep.subr.bf16.mxu0 0
        %696 = vmatpush1.bf16.xpose.msra.mxu0 0
        %697 = vmatprep.subr.bf16.mxu0 0
        %698 = vmatpush1.bf16.xpose.msra.mxu0 0
        %699 = vmatprep.subr.bf16.mxu0 0
        %700 = vmatpush1.bf16.xpose.msra.mxu0 0
        %701 = vmatprep.mubr.bf16.mxu0 0
        %702 = vmatmul.mubr.bf16.gmra.mrb[0].mxu0 %v664
        %v703 = vpop.f32.mrb[0].mxu0
        %v704 = vadd.f32 0.0, %v703
        %v705 = vpop.f32.mrb[0].mxu0
        %v706 = vpop.f32.mrb[0].mxu0
        %v707 = vpop.f32.mrb[0].mxu0
        %708 = vdwg.mxu0
        %v709 = vsel %vm596, %v704, -inf
        %710 = vmax.xlane.f32.xlu0 %v709
        %v711 = vpop.xlane.xlu0 %710
        %v712 = vsub.f32 %v704, %v711
        %v713 = vmul.f32 %v712, 1.442695
        %v714 = vpow.pop %v713
        %v715 = vsel %vm596, %v714, 0.0
        %716 = vadd.xlane.f32.xlu0 %v715
        %v717 = vpop.xlane.xlu0 %716
        %v718 = vpack.c.bf16 %v714, %v714
        %720 = vrot.lane.b32.xlu0 %v548, 96
        %v721 = vpop.permute.xlu0 %720
        %v723 = vsel %vm596, %v718, 0
        %v726 = vsel %vm610, %v721, 0
        %728 = vmatprep.subr.bf16.mxu0 0
        %729 = vmatpush1.bf16.msra.mxu0 %v726
        %730 = vmatprep.subr.bf16.mxu0 0
        %731 = vmatpush1.bf16.msra.mxu0 0
        %732 = vmatprep.subr.bf16.mxu0 0
        %733 = vmatpush1.bf16.msra.mxu0 0
        %734 = vmatprep.subr.bf16.mxu0 0
        %735 = vmatpush1.bf16.msra.mxu0 0
        %736 = vmatprep.subr.bf16.mxu0 0
        %737 = vmatpush1.bf16.msra.mxu0 0
        %738 = vmatprep.subr.bf16.mxu0 0
        %739 = vmatpush1.bf16.msra.mxu0 0
        %740 = vmatprep.subr.bf16.mxu0 0
        %741 = vmatpush1.bf16.msra.mxu0 0
        %742 = vmatprep.subr.bf16.mxu0 0
        %743 = vmatpush1.bf16.msra.mxu0 0
        %744 = vmatprep.subr.bf16.mxu0 0
        %745 = vmatpush1.bf16.msra.mxu0 0
        %746 = vmatprep.subr.bf16.mxu0 0
        %747 = vmatpush1.bf16.msra.mxu0 0
        %748 = vmatprep.subr.bf16.mxu0 0
        %749 = vmatpush1.bf16.msra.mxu0 0
        %750 = vmatprep.subr.bf16.mxu0 0
        %751 = vmatpush1.bf16.msra.mxu0 0
        %752 = vmatprep.subr.bf16.mxu0 0
        %753 = vmatpush1.bf16.msra.mxu0 0
        %754 = vmatprep.subr.bf16.mxu0 0
        %755 = vmatpush1.bf16.msra.mxu0 0
        %756 = vmatprep.subr.bf16.mxu0 0
        %757 = vmatpush1.bf16.msra.mxu0 0
        %758 = vmatprep.subr.bf16.mxu0 0
        %759 = vmatpush1.bf16.msra.mxu0 0
        %760 = vmatprep.mubr.bf16.mxu0 0
        %761 = vmatmul.mubr.bf16.gmra.mrb[0].mxu0 %v723
        %v762 = vpop.f32.mrb[0].mxu0
        %v763 = vadd.f32 0.0, %v762
        %v764 = vpop.f32.mrb[0].mxu0
        %v765 = vpop.f32.mrb[0].mxu0
        %v766 = vpop.f32.mrb[0].mxu0
        %767 = vdwg.mxu0
        %v768 = vrcp.pop %v717
        %v769 = vmul.f32 %v763, %v768
        %v770 = vpack.c.bf16 %v769, %v769
        %v775 = vunpack.c.l.b16 %v534
        %v776 = vunpack.c.l.b16 %v535
        %v777 = vunpack.c.l.b16 %v536
        %v778 = vunpack.c.l.b16 %v537
        %v779 = vpack.c.b16 %v776, %v775
        %v780 = vpack.c.b16 %v778, %v777
        %v784 = vsel %vm549, %v770, 0
        %786 = vmatprep.subr.bf16.mxu0 0
        %787 = vmatpush1.bf16.msra.mxu0 %v779
        %788 = vmatprep.subr.bf16.mxu0 0
        %789 = vmatpush1.bf16.msra.mxu0 %v780
        %790 = vmatprep.subr.bf16.mxu0 0
        %791 = vmatpush1.bf16.msra.mxu0 0
        %792 = vmatprep.subr.bf16.mxu0 0
        %793 = vmatpush1.bf16.msra.mxu0 0
        %794 = vmatprep.subr.bf16.mxu0 0
        %795 = vmatpush1.bf16.msra.mxu0 0
        %796 = vmatprep.subr.bf16.mxu0 0
        %797 = vmatpush1.bf16.msra.mxu0 0
        %798 = vmatprep.subr.bf16.mxu0 0
        %799 = vmatpush1.bf16.msra.mxu0 0
        %800 = vmatprep.subr.bf16.mxu0 0
        %801 = vmatpush1.bf16.msra.mxu0 0
        %802 = vmatprep.subr.bf16.mxu0 0
        %803 = vmatpush1.bf16.msra.mxu0 0
        %804 = vmatprep.subr.bf16.mxu0 0
        %805 = vmatpush1.bf16.msra.mxu0 0
        %806 = vmatprep.subr.bf16.mxu0 0
        %807 = vmatpush1.bf16.msra.mxu0 0
        %808 = vmatprep.subr.bf16.mxu0 0
        %809 = vmatpush1.bf16.msra.mxu0 0
        %810 = vmatprep.subr.bf16.mxu0 0
        %811 = vmatpush1.bf16.msra.mxu0 0
        %812 = vmatprep.subr.bf16.mxu0 0
        %813 = vmatpush1.bf16.msra.mxu0 0
        %814 = vmatprep.subr.bf16.mxu0 0
        %815 = vmatpush1.bf16.msra.mxu0 0
        %816 = vmatprep.subr.bf16.mxu0 0
        %817 = vmatpush1.bf16.msra.mxu0 0
        %818 = vmatprep.mubr.bf16.mxu0 0
        %819 = vmatmul.mubr.bf16.gmra.mrb[0].mxu0 %v784
        %v820 = vpop.f32.mrb[0].mxu0
        %v821 = vadd.f32 0.0, %v820
        %v822 = vpop.f32.mrb[0].mxu0
        %v823 = vpop.f32.mrb[0].mxu0
        %v824 = vpop.f32.mrb[0].mxu0
        %825 = vdwg.mxu0
        %v830 = vunpack.c.l.b16 %v530
        %v831 = vunpack.c.l.b16 %v531
        %v832 = vunpack.c.l.b16 %v532
        %v833 = vunpack.c.l.b16 %v533
        %v834 = vpack.c.b16 %v831, %v830
        %v835 = vpack.c.b16 %v833, %v832
        %v839 = vsel %vm549, %v656, 0
        %841 = vmatprep.subr.bf16.mxu0 0
        %842 = vmatpush1.bf16.msra.mxu0 %v834
        %843 = vmatprep.subr.bf16.mxu0 0
        %844 = vmatpush1.bf16.msra.mxu0 %v835
        %845 = vmatprep.subr.bf16.mxu0 0
        %846 = vmatpush1.bf16.msra.mxu0 0
        %847 = vmatprep.subr.bf16.mxu0 0
        %848 = vmatpush1.bf16.msra.mxu0 0
        %849 = vmatprep.subr.bf16.mxu0 0
        %850 = vmatpush1.bf16.msra.mxu0 0
        %851 = vmatprep.subr.bf16.mxu0 0
        %852 = vmatpush1.bf16.msra.mxu0 0
        %853 = vmatprep.subr.bf16.mxu0 0
        %854 = vmatpush1.bf16.msra.mxu0 0
        %855 = vmatprep.subr.bf16.mxu0 0
        %856 = vmatpush1.bf16.msra.mxu0 0
        %857 = vmatprep.subr.bf16.mxu0 0
        %858 = vmatpush1.bf16.msra.mxu0 0
        %859 = vmatprep.subr.bf16.mxu0 0
        %860 = vmatpush1.bf16.msra.mxu0 0
        %861 = vmatprep.subr.bf16.mxu0 0
        %862 = vmatpush1.bf16.msra.mxu0 0
        %863 = vmatprep.subr.bf16.mxu0 0
        %864 = vmatpush1.bf16.msra.mxu0 0
        %865 = vmatprep.subr.bf16.mxu0 0
        %866 = vmatpush1.bf16.msra.mxu0 0
        %867 = vmatprep.subr.bf16.mxu0 0
        %868 = vmatpush1.bf16.msra.mxu0 0
        %869 = vmatprep.subr.bf16.mxu0 0
        %870 = vmatpush1.bf16.msra.mxu0 0
        %871 = vmatprep.subr.bf16.mxu0 0
        %872 = vmatpush1.bf16.msra.mxu0 0
        %873 = vmatprep.mubr.bf16.mxu0 0
        %874 = vmatmul.mubr.bf16.gmra.mrb[0].mxu0 %v839
        %v875 = vpop.f32.mrb[0].mxu0
        %v876 = vadd.f32 %v821, %v875
        %v877 = vpop.f32.mrb[0].mxu0
        %v878 = vpop.f32.mrb[0].mxu0
        %v879 = vpop.f32.mrb[0].mxu0
        %880 = vdwg.mxu0
        %881 = vrot.lane.b32.xlu0 %v546, 64
        %v882 = vpop.permute.xlu0 %881
        %883 = vrot.lane.b32.xlu0 %v547, 64
        %v884 = vpop.permute.xlu0 %883
        %v886 = vsel %vm549, %v882, 0
        %v889 = vsel %vm549, %v884, 0
        %891 = vmatprep.subr.bf16.mxu0 0
        %892 = vmatpush1.bf16.xpose.msra.mxu0 %v889
        %893 = vmatprep.subr.bf16.mxu0 0
        %894 = vmatpush1.bf16.xpose.msra.mxu0 0
        %895 = vmatprep.subr.bf16.mxu0 0
        %896 = vmatpush1.bf16.xpose.msra.mxu0 0
        %897 = vmatprep.subr.bf16.mxu0 0
        %898 = vmatpush1.bf16.xpose.msra.mxu0 0
        %899 = vmatprep.subr.bf16.mxu0 0
        %900 = vmatpush1.bf16.xpose.msra.mxu0 0
        %901 = vmatprep.subr.bf16.mxu0 0
        %902 = vmatpush1.bf16.xpose.msra.mxu0 0
        %903 = vmatprep.subr.bf16.mxu0 0
        %904 = vmatpush1.bf16.xpose.msra.mxu0 0
        %905 = vmatprep.subr.bf16.mxu0 0
        %906 = vmatpush1.bf16.xpose.msra.mxu0 0
        %907 = vmatprep.subr.bf16.mxu0 0
        %908 = vmatpush1.bf16.xpose.msra.mxu0 0
        %909 = vmatprep.subr.bf16.mxu0 0
        %910 = vmatpush1.bf16.xpose.msra.mxu0 0
        %911 = vmatprep.subr.bf16.mxu0 0
        %912 = vmatpush1.bf16.xpose.msra.mxu0 0
        %913 = vmatprep.subr.bf16.mxu0 0
        %914 = vmatpush1.bf16.xpose.msra.mxu0 0
        %915 = vmatprep.subr.bf16.mxu0 0
        %916 = vmatpush1.bf16.xpose.msra.mxu0 0
        %917 = vmatprep.subr.bf16.mxu0 0
        %918 = vmatpush1.bf16.xpose.msra.mxu0 0
        %919 = vmatprep.subr.bf16.mxu0 0
        %920 = vmatpush1.bf16.xpose.msra.mxu0 0
        %921 = vmatprep.subr.bf16.mxu0 0
        %922 = vmatpush1.bf16.xpose.msra.mxu0 0
        %923 = vmatprep.mubr.bf16.mxu0 0
        %924 = vmatmul.mubr.bf16.gmra.mrb[0].mxu0 %v886
        %v925 = vpop.f32.mrb[0].mxu0
        %v926 = vadd.f32 0.0, %v925
        %v927 = vpop.f32.mrb[0].mxu0
        %v928 = vpop.f32.mrb[0].mxu0
        %v929 = vpop.f32.mrb[0].mxu0
        %930 = vdwg.mxu0
        %v931 = vsel %vm596, %v926, -inf
        %932 = vmax.xlane.f32.xlu0 %v931
        %v933 = vpop.xlane.xlu0 %932
        %v934 = vsub.f32 %v926, %v933
        %v935 = vmul.f32 %v934, 1.442695
        %v936 = vpow.pop %v935
        %v937 = vsel %vm596, %v936, 0.0
        %938 = vadd.xlane.f32.xlu0 %v937
        %v939 = vpop.xlane.xlu0 %938
        %v940 = vpack.c.bf16 %v936, %v936
        %941 = vrot.lane.b32.xlu0 %v548, 64
        %v942 = vpop.permute.xlu0 %941
        %v944 = vsel %vm596, %v940, 0
        %v947 = vsel %vm610, %v942, 0
        %949 = vmatprep.subr.bf16.mxu0 0
        %950 = vmatpush1.bf16.msra.mxu0 %v947
        %951 = vmatprep.subr.bf16.mxu0 0
        %952 = vmatpush1.bf16.msra.mxu0 0
        %953 = vmatprep.subr.bf16.mxu0 0
        %954 = vmatpush1.bf16.msra.mxu0 0
        %955 = vmatprep.subr.bf16.mxu0 0
        %956 = vmatpush1.bf16.msra.mxu0 0
        %957 = vmatprep.subr.bf16.mxu0 0
        %958 = vmatpush1.bf16.msra.mxu0 0
        %959 = vmatprep.subr.bf16.mxu0 0
        %960 = vmatpush1.bf16.msra.mxu0 0
        %961 = vmatprep.subr.bf16.mxu0 0
        %962 = vmatpush1.bf16.msra.mxu0 0
        %963 = vmatprep.subr.bf16.mxu0 0
        %964 = vmatpush1.bf16.msra.mxu0 0
        %965 = vmatprep.subr.bf16.mxu0 0
        %966 = vmatpush1.bf16.msra.mxu0 0
        %967 = vmatprep.subr.bf16.mxu0 0
        %968 = vmatpush1.bf16.msra.mxu0 0
        %969 = vmatprep.subr.bf16.mxu0 0
        %970 = vmatpush1.bf16.msra.mxu0 0
        %971 = vmatprep.subr.bf16.mxu0 0
        %972 = vmatpush1.bf16.msra.mxu0 0
        %973 = vmatprep.subr.bf16.mxu0 0
        %974 = vmatpush1.bf16.msra.mxu0 0
        %975 = vmatprep.subr.bf16.mxu0 0
        %976 = vmatpush1.bf16.msra.mxu0 0
        %977 = vmatprep.subr.bf16.mxu0 0
        %978 = vmatpush1.bf16.msra.mxu0 0
        %979 = vmatprep.subr.bf16.mxu0 0
        %980 = vmatpush1.bf16.msra.mxu0 0
        %981 = vmatprep.mubr.bf16.mxu0 0
        %982 = vmatmul.mubr.bf16.gmra.mrb[0].mxu0 %v944
        %v983 = vpop.f32.mrb[0].mxu0
        %v984 = vadd.f32 0.0, %v983
        %v985 = vpop.f32.mrb[0].mxu0
        %v986 = vpop.f32.mrb[0].mxu0
        %v987 = vpop.f32.mrb[0].mxu0
        %988 = vdwg.mxu0
        %v989 = vrcp.pop %v939
        %v990 = vmul.f32 %v984, %v989
        %v991 = vpack.c.bf16 %v990, %v990
        %v996 = vunpack.c.l.b16 %v538
        %v997 = vunpack.c.l.b16 %v539
        %v998 = vunpack.c.l.b16 %v540
        %v999 = vunpack.c.l.b16 %v541
        %v1000 = vpack.c.b16 %v997, %v996
        %v1001 = vpack.c.b16 %v999, %v998
        %v1005 = vsel %vm549, %v991, 0
        %1007 = vmatprep.subr.bf16.mxu0 0
        %1008 = vmatpush1.bf16.msra.mxu0 %v1000
        %1009 = vmatprep.subr.bf16.mxu0 0
        %1010 = vmatpush1.bf16.msra.mxu0 %v1001
        %1011 = vmatprep.subr.bf16.mxu0 0
        %1012 = vmatpush1.bf16.msra.mxu0 0
        %1013 = vmatprep.subr.bf16.mxu0 0
        %1014 = vmatpush1.bf16.msra.mxu0 0
        %1015 = vmatprep.subr.bf16.mxu0 0
        %1016 = vmatpush1.bf16.msra.mxu0 0
        %1017 = vmatprep.subr.bf16.mxu0 0
        %1018 = vmatpush1.bf16.msra.mxu0 0
        %1019 = vmatprep.subr.bf16.mxu0 0
        %1020 = vmatpush1.bf16.msra.mxu0 0
        %1021 = vmatprep.subr.bf16.mxu0 0
        %1022 = vmatpush1.bf16.msra.mxu0 0
        %1023 = vmatprep.subr.bf16.mxu0 0
        %1024 = vmatpush1.bf16.msra.mxu0 0
        %1025 = vmatprep.subr.bf16.mxu0 0
        %1026 = vmatpush1.bf16.msra.mxu0 0
        %1027 = vmatprep.subr.bf16.mxu0 0
        %1028 = vmatpush1.bf16.msra.mxu0 0
        %1029 = vmatprep.subr.bf16.mxu0 0
        %1030 = vmatpush1.bf16.msra.mxu0 0
        %1031 = vmatprep.subr.bf16.mxu0 0
        %1032 = vmatpush1.bf16.msra.mxu0 0
        %1033 = vmatprep.subr.bf16.mxu0 0
        %1034 = vmatpush1.bf16.msra.mxu0 0
        %1035 = vmatprep.subr.bf16.mxu0 0
        %1036 = vmatpush1.bf16.msra.mxu0 0
        %1037 = vmatprep.subr.bf16.mxu0 0
        %1038 = vmatpush1.bf16.msra.mxu0 0
        %1039 = vmatprep.mubr.bf16.mxu0 0
        %1040 = vmatmul.mubr.bf16.gmra.mrb[0].mxu0 %v1005
        %v1041 = vpop.f32.mrb[0].mxu0
        %v1042 = vadd.f32 0.0, %v1041
        %v1043 = vpop.f32.mrb[0].mxu0
        %v1044 = vpop.f32.mrb[0].mxu0
        %v1045 = vpop.f32.mrb[0].mxu0
        %1046 = vdwg.mxu0
        %v1047 = vadd.f32 %v876, %v1042
        %1048 = vrot.lane.b32.xlu0 %v546, 32
        %v1049 = vpop.permute.xlu0 %1048
        %1050 = vrot.lane.b32.xlu0 %v547, 32
        %v1051 = vpop.permute.xlu0 %1050
        %v1053 = vsel %vm549, %v1049, 0
        %v1056 = vsel %vm549, %v1051, 0
        %1058 = vmatprep.subr.bf16.mxu0 0
        %1059 = vmatpush1.bf16.xpose.msra.mxu0 %v1056
        %1060 = vmatprep.subr.bf16.mxu0 0
        %1061 = vmatpush1.bf16.xpose.msra.mxu0 0
        %1062 = vmatprep.subr.bf16.mxu0 0
        %1063 = vmatpush1.bf16.xpose.msra.mxu0 0
        %1064 = vmatprep.subr.bf16.mxu0 0
        %1065 = vmatpush1.bf16.xpose.msra.mxu0 0
        %1066 = vmatprep.subr.bf16.mxu0 0
        %1067 = vmatpush1.bf16.xpose.msra.mxu0 0
        %1068 = vmatprep.subr.bf16.mxu0 0
        %1069 = vmatpush1.bf16.xpose.msra.mxu0 0
        %1070 = vmatprep.subr.bf16.mxu0 0
        %1071 = vmatpush1.bf16.xpose.msra.mxu0 0
        %1072 = vmatprep.subr.bf16.mxu0 0
        %1073 = vmatpush1.bf16.xpose.msra.mxu0 0
        %1074 = vmatprep.subr.bf16.mxu0 0
        %1075 = vmatpush1.bf16.xpose.msra.mxu0 0
        %1076 = vmatprep.subr.bf16.mxu0 0
        %1077 = vmatpush1.bf16.xpose.msra.mxu0 0
        %1078 = vmatprep.subr.bf16.mxu0 0
        %1079 = vmatpush1.bf16.xpose.msra.mxu0 0
        %1080 = vmatprep.subr.bf16.mxu0 0
        %1081 = vmatpush1.bf16.xpose.msra.mxu0 0
        %1082 = vmatprep.subr.bf16.mxu0 0
        %1083 = vmatpush1.bf16.xpose.msra.mxu0 0
        %1084 = vmatprep.subr.bf16.mxu0 0
        %1085 = vmatpush1.bf16.xpose.msra.mxu0 0
        %1086 = vmatprep.subr.bf16.mxu0 0
        %1087 = vmatpush1.bf16.xpose.msra.mxu0 0
        %1088 = vmatprep.subr.bf16.mxu0 0
        %1089 = vmatpush1.bf16.xpose.msra.mxu0 0
        %1090 = vmatprep.mubr.bf16.mxu0 0
        %1091 = vmatmul.mubr.bf16.gmra.mrb[0].mxu0 %v1053
        %v1092 = vpop.f32.mrb[0].mxu0
        %v1093 = vadd.f32 0.0, %v1092
        %v1094 = vpop.f32.mrb[0].mxu0
        %v1095 = vpop.f32.mrb[0].mxu0
        %v1096 = vpop.f32.mrb[0].mxu0
        %1097 = vdwg.mxu0
        %v1098 = vsel %vm596, %v1093, -inf
        %1099 = vmax.xlane.f32.xlu0 %v1098
        %v1100 = vpop.xlane.xlu0 %1099
        %v1101 = vsub.f32 %v1093, %v1100
        %v1102 = vmul.f32 %v1101, 1.442695
        %v1103 = vpow.pop %v1102
        %v1104 = vsel %vm596, %v1103, 0.0
        %1105 = vadd.xlane.f32.xlu0 %v1104
        %v1106 = vpop.xlane.xlu0 %1105
        %v1107 = vpack.c.bf16 %v1103, %v1103
        %1108 = vrot.lane.b32.xlu0 %v548, 32
        %v1109 = vpop.permute.xlu0 %1108
        %v1111 = vsel %vm596, %v1107, 0
        %v1114 = vsel %vm610, %v1109, 0
        %1116 = vmatprep.subr.bf16.mxu0 0
        %1117 = vmatpush1.bf16.msra.mxu0 %v1114
        %1118 = vmatprep.subr.bf16.mxu0 0
        %1119 = vmatpush1.bf16.msra.mxu0 0
        %1120 = vmatprep.subr.bf16.mxu0 0
        %1121 = vmatpush1.bf16.msra.mxu0 0
        %1122 = vmatprep.subr.bf16.mxu0 0
        %1123 = vmatpush1.bf16.msra.mxu0 0
        %1124 = vmatprep.subr.bf16.mxu0 0
        %1125 = vmatpush1.bf16.msra.mxu0 0
        %1126 = vmatprep.subr.bf16.mxu0 0
        %1127 = vmatpush1.bf16.msra.mxu0 0
        %1128 = vmatprep.subr.bf16.mxu0 0
        %1129 = vmatpush1.bf16.msra.mxu0 0
        %1130 = vmatprep.subr.bf16.mxu0 0
        %1131 = vmatpush1.bf16.msra.mxu0 0
        %1132 = vmatprep.subr.bf16.mxu0 0
        %1133 = vmatpush1.bf16.msra.mxu0 0
        %1134 = vmatprep.subr.bf16.mxu0 0
        %1135 = vmatpush1.bf16.msra.mxu0 0
        %1136 = vmatprep.subr.bf16.mxu0 0
        %1137 = vmatpush1.bf16.msra.mxu0 0
        %1138 = vmatprep.subr.bf16.mxu0 0
        %1139 = vmatpush1.bf16.msra.mxu0 0
        %1140 = vmatprep.subr.bf16.mxu0 0
        %1141 = vmatpush1.bf16.msra.mxu0 0
        %1142 = vmatprep.subr.bf16.mxu0 0
        %1143 = vmatpush1.bf16.msra.mxu0 0
        %1144 = vmatprep.subr.bf16.mxu0 0
        %1145 = vmatpush1.bf16.msra.mxu0 0
        %1146 = vmatprep.subr.bf16.mxu0 0
        %1147 = vmatpush1.bf16.msra.mxu0 0
        %1148 = vmatprep.mubr.bf16.mxu0 0
        %1149 = vmatmul.mubr.bf16.gmra.mrb[0].mxu0 %v1111
        %v1150 = vpop.f32.mrb[0].mxu0
        %v1151 = vadd.f32 0.0, %v1150
        %v1152 = vpop.f32.mrb[0].mxu0
        %v1153 = vpop.f32.mrb[0].mxu0
        %v1154 = vpop.f32.mrb[0].mxu0
        %1155 = vdwg.mxu0
        %v1156 = vrcp.pop %v1106
        %v1157 = vmul.f32 %v1151, %v1156
        %v1158 = vpack.c.bf16 %v1157, %v1157
        %v1163 = vunpack.c.l.b16 %v542
        %v1164 = vunpack.c.l.b16 %v543
        %v1165 = vunpack.c.l.b16 %v544
        %v1166 = vunpack.c.l.b16 %v545
        %v1167 = vpack.c.b16 %v1164, %v1163
        %v1168 = vpack.c.b16 %v1166, %v1165
        %v1172 = vsel %vm549, %v1158, 0
        %1174 = vmatprep.subr.bf16.mxu0 0
        %1175 = vmatpush1.bf16.msra.mxu0 %v1167
        %1176 = vmatprep.subr.bf16.mxu0 0
        %1177 = vmatpush1.bf16.msra.mxu0 %v1168
        %1178 = vmatprep.subr.bf16.mxu0 0
        %1179 = vmatpush1.bf16.msra.mxu0 0
        %1180 = vmatprep.subr.bf16.mxu0 0
        %1181 = vmatpush1.bf16.msra.mxu0 0
        %1182 = vmatprep.subr.bf16.mxu0 0
        %1183 = vmatpush1.bf16.msra.mxu0 0
        %1184 = vmatprep.subr.bf16.mxu0 0
        %1185 = vmatpush1.bf16.msra.mxu0 0
        %1186 = vmatprep.subr.bf16.mxu0 0
        %1187 = vmatpush1.bf16.msra.mxu0 0
        %1188 = vmatprep.subr.bf16.mxu0 0
        %1189 = vmatpush1.bf16.msra.mxu0 0
        %1190 = vmatprep.subr.bf16.mxu0 0
        %1191 = vmatpush1.bf16.msra.mxu0 0
        %1192 = vmatprep.subr.bf16.mxu0 0
        %1193 = vmatpush1.bf16.msra.mxu0 0
        %1194 = vmatprep.subr.bf16.mxu0 0
        %1195 = vmatpush1.bf16.msra.mxu0 0
        %1196 = vmatprep.subr.bf16.mxu0 0
        %1197 = vmatpush1.bf16.msra.mxu0 0
        %1198 = vmatprep.subr.bf16.mxu0 0
        %1199 = vmatpush1.bf16.msra.mxu0 0
        %1200 = vmatprep.subr.bf16.mxu0 0
        %1201 = vmatpush1.bf16.msra.mxu0 0
        %1202 = vmatprep.subr.bf16.mxu0 0
        %1203 = vmatpush1.bf16.msra.mxu0 0
        %1204 = vmatprep.subr.bf16.mxu0 0
        %1205 = vmatpush1.bf16.msra.mxu0 0
        %1206 = vmatprep.mubr.bf16.mxu0 0
        %1207 = vmatmul.mubr.bf16.gmra.mrb[0].mxu0 %v1172
        %v1208 = vpop.f32.mrb[0].mxu0
        %v1209 = vadd.f32 0.0, %v1208
        %v1210 = vpop.f32.mrb[0].mxu0
        %v1211 = vpop.f32.mrb[0].mxu0
        %v1212 = vpop.f32.mrb[0].mxu0
        %1213 = vdwg.mxu0
        %v1214 = vadd.f32 %v1047, %v1209
        %v1215 = vld [vmem:[%s4] sm:$0x1]
        %v1217 = vlaneseq
        %v1218 = vshrl.u32 %v1217, 7
        %v1219 = vsub.s32 0, %v1218
        %v1220 = vrot.slane %v1215, %v1219
        %v1222 = vadd.f32 %v1214, %v1220
        %1223 = vst [vmem:[%s268] sm:$0xff] %v1222
        %s1224 = sand.u32 %s141, 1
        %s1225 = scalar_lea.sflag [#allocation4], %s1224
        %s1226 = sand.u32 %s141, 1
        %s1227 = smul.addr %s1226, 8
        %s1228 = scalar_lea.vmem [#allocation8], %s1227
        // Predicated region
        $region53: #{tpu_custom_call.1} parent=39 // pred_check
          %p1229 = pneg %p151
        $region54: #{tpu_custom_call.1} parent=39 // pred_check_branch
          %1231 = sbr.rel (%p1229) target = $region56
        $region55: #{tpu_custom_call.1} parent=39 // pred_region
          %s1233 = ssub.s32 128, 128
          %1234 = vsyncadd %s1225, %s1233
          %s1235 = smul.addr %s23, 128
          %s1236 = scalar_lea.hbm %s5, %s1235
          %s1238 = sshll.u32 %s1228, 4
          %s1239 = int_to_ptr.vmem [resolvable:$true] %s1238
          %1241 = dma.vmem_to_hbm [thread:$0]  %s1239, 128, %s1236, %s1225
        $region56: #{tpu_custom_call.1} parent=39 // pred_fallthru
          _
      $region40: #{tpu_custom_call.1} parent=5 // pred_fallthru
        _
      %p1242 = scmp.le.s32.totalorder 2, %s18
      // Predicated region
      $region57: #{tpu_custom_call.1} parent=5 // pred_check
        %p1243 = pneg %p1242
      $region58: #{tpu_custom_call.1} parent=5 // pred_check_branch
        %1245 = sbr.rel (%p1243) target = $region60
      $region59: #{tpu_custom_call.1} parent=5 // pred_region
        %s1246 = ssub.s32 %s18, 2
        // Predicated region
        $region61: #{tpu_custom_call.1} parent=59 // pred_check
          %p1247 = pneg %p157
        $region62: #{tpu_custom_call.1} parent=59 // pred_check_branch
          %1249 = sbr.rel (%p1247) target = $region64
        $region63: #{tpu_custom_call.1} parent=59 // pred_region
          %s1250 = sand.u32 %s142, 1
          %s1251 = scalar_lea.sflag [#allocation4], %s1250
          %s1252 = sand.u32 %s142, 1
          %s1253 = smul.addr %s1252, 8
          %s1254 = scalar_lea.vmem [#allocation8], %s1253
          %1255 = dma.done %s1251, 128
        $region64: #{tpu_custom_call.1} parent=59 // pred_fallthru
          _
      $region60: #{tpu_custom_call.1} parent=5 // pred_fallthru
        _
    $region6: #{tpu_custom_call.1} parent=1 // loop_footer
      %s22 = sadd.s32 1, %s18
    $region7: #{tpu_custom_call.1} parent=1 // loop_footer_branch
      %17 = sbr.rel target = $region3
    $region8: #{tpu_custom_call.1} parent=1 // loop_exit
      _
    %1256 = vsyncpa [#allocation3], 1
    %s1257 = scalar_lea.sflag [#allocation3], 1
    %1258 = vsyncpa %s1257, 1
    %1259 = vsyncpa [#allocation6], 1
    %1260 = vsyncpa [#allocation4], 1
    %s1261 = scalar_lea.sflag [#allocation4], 1
    %1262 = vsyncpa %s1261, 1

</llo_original>
